<compile_context>
chip_gen: v5e
topology: v5e:2x2
jax: 0.10.0
libtpu: 0.0.40
codegen_flags: <defaults>
</compile_context>

<pallas_src>
import functools

import jax
import jax.numpy as jnp
from jax import lax
from jax.experimental import pallas as pl
from jax.experimental.pallas import tpu as pltpu

# ---------------- sizes (small, consistent with the module) ----------------
B = 2            # batch of sheets
S = 8            # max_sheet_len (rows per sheet)
T = 16           # text_seq_output_len (module default 50, small here)
V = 200          # vocab_size (module default 20000, small synthetic vocab)
E = 32           # embedding_dim
F = 15           # n_numeric_features (9 base features + 6 keyword flags)
H = 32           # lstm_hidden_dim
C = 5            # n_classes
D = E + F        # combined_feature_dim


def _num_shards_for_device(batch):
    """2 shards on v7x (2 TensorCores/chip), 1 shard on v5e/v6e (1 TC)."""
    try:
        kind = jax.devices()[0].device_kind.lower()
    except Exception:
        return 1
    ncores = 2 if ("v7" in kind or "tpu7" in kind) else 1
    ns = max(1, min(batch, ncores))
    return ns if batch % ns == 0 else 1


# ------------------ fused per-shard kernel (one grid step = Bs sheets) ------
def fused_kernel(text_ref, num_ref, mask_ref, w_in_ref, whh_ref, wfc_ref,
                 pack_ref, emis_ref, score_ref, hist_ref):
    s, bb, e = text_ref.shape                      # time-major: (S, Bs, E)
    f = num_ref.shape[-1]
    h = whh_ref.shape[0]
    c = wfc_ref.shape[-1]
    n = s * bb

    # ---- single-DMA parameter pack (f32) ----
    b_cat = pack_ref[0:1, :]                       # (1, 8H) merged LSTM biases
    gamma = pack_ref[1:2, 0:f]                     # (1, F) LayerNorm gamma
    beta = pack_ref[2:3, 0:f]                      # (1, F) LayerNorm beta
    bfc = pack_ref[3:4, 0:c]                       # (1, C) fc bias
    start = pack_ref[4:5, 0:c]                     # (1, C) CRF start
    end = pack_ref[5:6, 0:c]                       # (1, C) CRF end
    trans = pack_ref[8:8 + c, 0:c]                 # (C, C) CRF transitions

    # ---- numeric LayerNorm (f32 VPU) ----
    nums = num_ref[...].reshape(n, f)
    mu = jnp.mean(nums, axis=-1, keepdims=True)
    var = jnp.mean((nums - mu) ** 2, axis=-1, keepdims=True)
    normed = (nums - mu) * lax.rsqrt(var + 1e-5) * gamma + beta

    # ---- hoisted LSTM input projections, both directions, time-major -------
    text2d = text_ref[...].reshape(n, e)           # bf16
    xproj = (jnp.dot(text2d, w_in_ref[0:e, :], preferred_element_type=jnp.float32)
             + jnp.dot(normed.astype(jnp.bfloat16), w_in_ref[e:e + f, :],
                       preferred_element_type=jnp.float32)
             + b_cat)                              # (S*Bs, 8H) f32, SSA

    whh = whh_ref[...]                             # (H, 8H) bf16: [whh_f | whh_b]
    msk = mask_ref[...]                            # (S, 2Bs, 1) f32 step validity
    is_fwd = lax.broadcasted_iota(jnp.int32, (2 * bb, 1), 0) < bb

    h_st = jnp.zeros((2 * bb, h), jnp.float32)     # rows 0:Bs fwd, Bs:2Bs bwd
    c_st = jnp.zeros((2 * bb, h), jnp.float32)
    fwd_rows = []
    bwd_rows = []
    for t in range(s):                             # S serial recurrence steps
        tb = s - 1 - t                             # backward direction time
        xp = jnp.concatenate(
            [xproj[t * bb:(t + 1) * bb, 0:4 * h],
             xproj[tb * bb:(tb + 1) * bb, 4 * h:8 * h]], axis=0)   # (2Bs, 4H)
        rec = jnp.dot(h_st.astype(jnp.bfloat16), whh,
                      preferred_element_type=jnp.float32)          # (2Bs, 8H)
        gates = xp + jnp.where(is_fwd, rec[:, 0:4 * h], rec[:, 4 * h:8 * h])
        sg = jax.nn.sigmoid(gates)                 # full-width EUP, slice i/f/o
        th = jnp.tanh(gates)                       # full-width EUP, slice g
        i_g = sg[:, 0 * h:1 * h]
        f_g = sg[:, 1 * h:2 * h]
        g_g = th[:, 2 * h:3 * h]
        o_g = sg[:, 3 * h:4 * h]
        c_new = f_g * c_st + i_g * g_g
        h_new = o_g * jnp.tanh(c_new)
        m_t = msk[t]                               # (2Bs, 1): fwd t<len, bwd tb<len
        h_keep = m_t * h_new                       # pad_packed zero-pads outputs
        h_st = h_keep + (1.0 - m_t) * h_st
        c_st = m_t * c_new + (1.0 - m_t) * c_st
        fwd_rows.append(h_keep[0:bb])              # states for time t
        bwd_rows.append(h_keep[bb:2 * bb])         # states for time S-1-t

    hf = jnp.concatenate(fwd_rows, axis=0)                       # (S*Bs, H)
    hb = jnp.concatenate(bwd_rows[::-1], axis=0)                 # (S*Bs, H)
    hcat = jnp.concatenate([hf, hb], axis=1).astype(jnp.bfloat16)  # (S*Bs, 2H)

    # ---- fc_to_crf: one fused matmul -----------------------------------
    emis = jnp.dot(hcat, wfc_ref[...], preferred_element_type=jnp.float32) + bfc
    emis_ref[...] = emis.reshape(s, bb, c)

    # ---- masked CRF Viterbi forward (emissions stay on-chip) ------------
    score = start + emis[0:bb]                                   # (Bs, C)
    hist_ref[0] = jnp.zeros((bb, c), jnp.int32)
    for t in range(1, s):
        emis_t = emis[t * bb:(t + 1) * bb]                               # (Bs, C)
        nxt = score[:, :, None] + trans[None, :, :] + emis_t[:, None, :]  # (Bs,C,C)
        best = jnp.max(nxt, axis=1)                                       # (Bs, C)
        iota = lax.broadcasted_iota(jnp.int32, nxt.shape, 1)
        # first-argmax over 'from' class (matches torch.max tie-breaking)
        idx = jnp.min(jnp.where(nxt == best[:, None, :], iota, c), axis=1)
        hist_ref[t] = idx
        m_t = msk[t, 0:bb]                                                # (Bs, 1)
        score = m_t * best + (1.0 - m_t) * score
    score_ref[...] = score + end


def fused_sheets(text_feat, numerics, lengths, p, num_shards):
    b, s, e = text_feat.shape
    f = numerics.shape[-1]
    c = p["wfc"].shape[-1]
    ns = num_shards if (num_shards >= 1 and b % num_shards == 0) else 1
    bb = b // ns

    def shard_tm(x):  # (B, S, X) -> (ns, S, Bs, X), time-major inside a shard
        return x.reshape(ns, bb, s, x.shape[-1]).transpose(0, 2, 1, 3)

    text_sh = shard_tm(text_feat.astype(jnp.bfloat16))
    num_sh = shard_tm(numerics.astype(jnp.float32))

    # Per-step validity masks: rows 0:Bs forward (t < len), Bs:2Bs backward
    # (S-1-t < len) -- reproduces pack_padded/pad_packed semantics.
    tidx = jnp.arange(s, dtype=jnp.int32)
    fwd_valid = (tidx[None, :] < lengths[:, None]).astype(jnp.float32)        # (B,S)
    bwd_valid = ((s - 1 - tidx)[None, :] < lengths[:, None]).astype(jnp.float32)

    def shard_mask(m):  # (B, S) -> (ns, S, Bs)
        return m.reshape(ns, bb, s).transpose(0, 2, 1)

    step_mask = jnp.concatenate(
        [shard_mask(fwd_valid), shard_mask(bwd_valid)], axis=2)[..., None]    # (ns,S,2Bs,1)

    def per_shard(tail):
        nd = len(tail)
        return pl.BlockSpec((None,) + tuple(tail),
                            lambda i, _nd=nd: (i,) + (0,) * _nd)

    def whole(arr):
        nd = arr.ndim
        return pl.BlockSpec(arr.shape, lambda i, _nd=nd: (0,) * _nd)

    grid_spec = pltpu.PrefetchScalarGridSpec(
        num_scalar_prefetch=0,
        grid=(ns,),
        in_specs=[
            per_shard((s, bb, e)),          # text features (bf16)
            per_shard((s, bb, f)),          # numeric features (f32)
            per_shard((s, 2 * bb, 1)),      # step validity masks (f32)
            whole(p["w_in"]),               # (D, 8H) bf16 input weights
            whole(p["whh_all"]),            # (H, 8H) bf16 recurrent weights
            whole(p["wfc"]),                # (2H, C) bf16 fc weights
            whole(p["pack"]),               # (16, 8H) f32 parameter pack
        ],
        out_specs=(
            per_shard((s, bb, c)),          # emissions
            per_shard((bb, c)),             # final Viterbi scores
            per_shard((s, bb, c)),          # backpointer history (int32)
        ),
    )
    emis, score, hist = pl.pallas_call(
        fused_kernel,
        out_shape=(jax.ShapeDtypeStruct((ns, s, bb, c), jnp.float32),
                   jax.ShapeDtypeStruct((ns, bb, c), jnp.float32),
                   jax.ShapeDtypeStruct((ns, s, bb, c), jnp.int32)),
        grid_spec=grid_spec,
        compiler_params=pltpu.CompilerParams(dimension_semantics=("parallel",)),
    )(text_sh, num_sh, step_mask, p["w_in"], p["whh_all"], p["wfc"], p["pack"])

    emissions = emis.transpose(0, 2, 1, 3).reshape(b, s, c)
    history = hist.transpose(0, 2, 1, 3).reshape(b, s, c)
    scores = score.reshape(b, c)
    return emissions, scores, history


# ------------- glue: Viterbi back-tracking (tiny sequential gather) ----------
def viterbi_backtrack(score_final, history, lengths):
    s_len = history.shape[1]
    best_last = jnp.argmax(score_final, axis=1).astype(jnp.int32)    # (B,)
    seq_end = lengths - 1                                            # (B,)

    def step(cur, t):
        cur = jnp.where(t == seq_end, best_last, cur)
        tag_t = jnp.where(t < lengths, cur, 0)
        bp = jnp.take_along_axis(history[:, t, :], cur[:, None], axis=1)[:, 0]
        cur = jnp.where((t >= 1) & (t <= seq_end), bp.astype(jnp.int32), cur)
        return cur, tag_t

    ts = jnp.arange(s_len - 1, -1, -1)
    _, tags_rev = lax.scan(step, jnp.zeros_like(best_last), ts)
    return jnp.flip(tags_rev, axis=0).T                              # (B, S) padded with 0


# ------------------------------- full forward -------------------------------
def row_classifier_forward(params, sheet_texts_ids, sheet_numerics, sheet_lengths,
                           num_shards=1):
    lengths = sheet_lengths.astype(jnp.int32)
    # Embedding gather + masked mean-pool stay in XLA so they fuse and the
    # (B,S,T,E) intermediate never reaches the kernel.
    # TODO(synk): at production vocab sizes consider an in-kernel gather with a
    # bf16 table and explicit vmem_limit_bytes (v7x has 64 MiB VMEM).
    emb = jnp.take(params["embedding"], sheet_texts_ids, axis=0)     # (B,S,T,E)
    tok_mask = (sheet_texts_ids != 0).astype(jnp.float32)[..., None]
    text_feat = ((emb * tok_mask).sum(axis=2)
                 / jnp.maximum(tok_mask.sum(axis=2), 1e-9))          # (B,S,E)

    emissions, scores, history = fused_sheets(
        text_feat, sheet_numerics, lengths, params, num_shards)
    tags = viterbi_backtrack(scores, history, lengths)
    # CRF.decode returns variable-length python lists; here: padded (B, S) int32.
    return tags, emissions


# ----------------------- deterministic parameter init -----------------------
def init_params(key):
    ks = jax.random.split(key, 14)

    def u(k, shape, scale):
        return jax.random.uniform(k, shape, jnp.float32, -scale, scale)

    emb = jax.random.normal(ks[0], (V, E), jnp.float32) * 0.1
    emb = emb.at[0].set(0.0)                                         # padding_idx = 0

    k_lstm = 1.0 / jnp.sqrt(jnp.float32(H))
    wih_f = u(ks[1], (4 * H, D), k_lstm); whh_f = u(ks[2], (4 * H, H), k_lstm)
    bih_f = u(ks[3], (4 * H,), k_lstm);   bhh_f = u(ks[4], (4 * H,), k_lstm)
    wih_b = u(ks[5], (4 * H, D), k_lstm); whh_b = u(ks[6], (4 * H, H), k_lstm)
    bih_b = u(ks[7], (4 * H,), k_lstm);   bhh_b = u(ks[8], (4 * H,), k_lstm)

    k_fc = 1.0 / jnp.sqrt(jnp.float32(2 * H))
    wfc = u(ks[9], (C, 2 * H), k_fc); bfc = u(ks[10], (C,), k_fc)
    crf_start = u(ks[11], (C,), 0.1)
    crf_end = u(ks[12], (C,), 0.1)
    crf_trans = u(ks[13], (C, C), 0.1)

    # MXU operands stored in bf16 (f32 accumulation happens in-kernel).
    w_in = jnp.concatenate([wih_f.T, wih_b.T], axis=1).astype(jnp.bfloat16)     # (D, 8H)
    whh_all = jnp.concatenate([whh_f.T, whh_b.T], axis=1).astype(jnp.bfloat16)  # (H, 8H)
    wfc_t = wfc.T.astype(jnp.bfloat16)                                          # (2H, C)

    # One f32 parameter pack: biases / LayerNorm affine / CRF params (one DMA).
    pack = jnp.zeros((16, 8 * H), jnp.float32)
    pack = pack.at[0, :].set(jnp.concatenate([bih_f + bhh_f, bih_b + bhh_b]))
    pack = pack.at[1, :F].set(jnp.ones((F,), jnp.float32))    # LayerNorm gamma
    pack = pack.at[2, :F].set(jnp.zeros((F,), jnp.float32))   # LayerNorm beta
    pack = pack.at[3, :C].set(bfc)
    pack = pack.at[4, :C].set(crf_start)
    pack = pack.at[5, :C].set(crf_end)
    pack = pack.at[8:8 + C, :C].set(crf_trans)

    return {"embedding": emb, "w_in": w_in, "whh_all": whh_all,
            "wfc": wfc_t, "pack": pack}


if __name__ == "__main__":
    key = jax.random.PRNGKey(0)
    kp, kid, kpad, knum = jax.random.split(key, 4)
    params = init_params(kp)

    ids = jax.random.randint(kid, (B, S, T), 2, V, dtype=jnp.int32)
    pad_mask = jax.random.uniform(kpad, (B, S, T)) < 0.3             # ~30% pad tokens
    sheet_texts_ids = jnp.where(pad_mask, 0, ids)
    sheet_numerics = jax.random.normal(knum, (B, S, F), jnp.float32)
    sheet_lengths = jnp.array([S, 5], dtype=jnp.int32)

    ns = _num_shards_for_device(B)                                   # 2 on v7x else 1
    forward = jax.jit(functools.partial(row_classifier_forward, num_shards=ns))
    tags, emissions = forward(params, sheet_texts_ids, sheet_numerics, sheet_lengths)
    jax.block_until_ready((tags, emissions))
    print("KERNEL_OK")
</pallas_src>

<mosaic_0001>
module attributes {stable_mosaic.version = 11 : i64} {
  func.func @fused_kernel(%arg0: i32, %arg1: memref<1x8x2x32xbf16, #tpu.memory_space<vmem>>, %arg2: memref<1x8x2x15xf32, #tpu.memory_space<vmem>>, %arg3: memref<1x8x4x1xf32, #tpu.memory_space<vmem>>, %arg4: memref<47x256xbf16, #tpu.memory_space<vmem>>, %arg5: memref<32x256xbf16, #tpu.memory_space<vmem>>, %arg6: memref<64x5xbf16, #tpu.memory_space<vmem>>, %arg7: memref<16x256xf32, #tpu.memory_space<vmem>>, %arg8: memref<1x8x2x5xf32, #tpu.memory_space<vmem>>, %arg9: memref<1x2x5xf32, #tpu.memory_space<vmem>>, %arg10: memref<1x8x2x5xi32, #tpu.memory_space<vmem>>) attributes {dimension_semantics = [#tpu.dimension_semantics<parallel>], iteration_bounds = array<i64: 1>, scalar_prefetch = 0 : i64, scratch_operands = 0 : i64, tpu.core_type = #tpu.core_type<tc>, window_params = [{transform_indices = @transform_0, window_bounds = array<i64: 1, 8, 2, 32>}, {transform_indices = @transform_1, window_bounds = array<i64: 1, 8, 2, 15>}, {transform_indices = @transform_2, window_bounds = array<i64: 1, 8, 4, 1>}, {pipeline_mode = #tpu.pipeline_mode<synchronous>, transform_indices = @transform_3, window_bounds = array<i64: 47, 256>}, {pipeline_mode = #tpu.pipeline_mode<synchronous>, transform_indices = @transform_4, window_bounds = array<i64: 32, 256>}, {pipeline_mode = #tpu.pipeline_mode<synchronous>, transform_indices = @transform_5, window_bounds = array<i64: 64, 5>}, {pipeline_mode = #tpu.pipeline_mode<synchronous>, transform_indices = @transform_6, window_bounds = array<i64: 16, 256>}, {transform_indices = @transform_7, window_bounds = array<i64: 1, 8, 2, 5>}, {transform_indices = @transform_8, window_bounds = array<i64: 1, 2, 5>}, {transform_indices = @transform_9, window_bounds = array<i64: 1, 8, 2, 5>}]} {
    %c0 = arith.constant 0 : index
    %c0_0 = arith.constant 0 : index
    %0 = vector.load %arg7[%c0, %c0_0] : memref<16x256xf32, #tpu.memory_space<vmem>>, vector<1x256xf32>
    %c1 = arith.constant 1 : index
    %c0_1 = arith.constant 0 : index
    %1 = vector.load %arg7[%c1, %c0_1] : memref<16x256xf32, #tpu.memory_space<vmem>>, vector<1x15xf32>
    %c2 = arith.constant 2 : index
    %c0_2 = arith.constant 0 : index
    %2 = vector.load %arg7[%c2, %c0_2] : memref<16x256xf32, #tpu.memory_space<vmem>>, vector<1x15xf32>
    %c3 = arith.constant 3 : index
    %c0_3 = arith.constant 0 : index
    %3 = vector.load %arg7[%c3, %c0_3] : memref<16x256xf32, #tpu.memory_space<vmem>>, vector<1x5xf32>
    %c4 = arith.constant 4 : index
    %c0_4 = arith.constant 0 : index
    %4 = vector.load %arg7[%c4, %c0_4] : memref<16x256xf32, #tpu.memory_space<vmem>>, vector<1x5xf32>
    %c5 = arith.constant 5 : index
    %c0_5 = arith.constant 0 : index
    %5 = vector.load %arg7[%c5, %c0_5] : memref<16x256xf32, #tpu.memory_space<vmem>>, vector<1x5xf32>
    %c8 = arith.constant 8 : index
    %c0_6 = arith.constant 0 : index
    %6 = vector.load %arg7[%c8, %c0_6] : memref<16x256xf32, #tpu.memory_space<vmem>>, vector<5x5xf32>
    %c0_7 = arith.constant 0 : index
    %c0_8 = arith.constant 0 : index
    %c0_9 = arith.constant 0 : index
    %c0_10 = arith.constant 0 : index
    %7 = vector.load %arg2[%c0_7, %c0_8, %c0_9, %c0_10] : memref<1x8x2x15xf32, #tpu.memory_space<vmem>>, vector<1x8x2x15xf32>
    %8 = vector.shape_cast %7 : vector<1x8x2x15xf32> to vector<8x2x15xf32>
    %9 = vector.shape_cast %8 : vector<8x2x15xf32> to vector<16x15xf32>
    %cst = arith.constant dense<0.000000e+00> : vector<16xf32>
    %10 = vector.multi_reduction <add>, %9, %cst [1] : vector<16x15xf32> to vector<16xf32>
    %11 = vector.shape_cast %10 : vector<16xf32> to vector<16x1xf32>
    %cst_11 = arith.constant 1.500000e+01 : f32
    %12 = vector.broadcast %cst_11 : f32 to vector<16x1xf32>
    %13 = arith.divf %11, %12 : vector<16x1xf32>
    %14 = vector.broadcast %13 : vector<16x1xf32> to vector<16x15xf32>
    %15 = arith.subf %9, %14 : vector<16x15xf32>
    %16 = arith.mulf %15, %15 : vector<16x15xf32>
    %cst_12 = arith.constant dense<0.000000e+00> : vector<16xf32>
    %17 = vector.multi_reduction <add>, %16, %cst_12 [1] : vector<16x15xf32> to vector<16xf32>
    %18 = vector.shape_cast %17 : vector<16xf32> to vector<16x1xf32>
    %cst_13 = arith.constant 1.500000e+01 : f32
    %19 = vector.broadcast %cst_13 : f32 to vector<16x1xf32>
    %20 = arith.divf %18, %19 : vector<16x1xf32>
    %21 = vector.broadcast %13 : vector<16x1xf32> to vector<16x15xf32>
    %22 = arith.subf %9, %21 : vector<16x15xf32>
    %cst_14 = arith.constant 9.99999974E-6 : f32
    %23 = vector.broadcast %cst_14 : f32 to vector<16x1xf32>
    %24 = arith.addf %20, %23 : vector<16x1xf32>
    %25 = math.rsqrt %24 : vector<16x1xf32>
    %26 = vector.broadcast %25 : vector<16x1xf32> to vector<16x15xf32>
    %27 = arith.mulf %22, %26 : vector<16x15xf32>
    %28 = vector.broadcast %1 : vector<1x15xf32> to vector<16x15xf32>
    %29 = arith.mulf %27, %28 : vector<16x15xf32>
    %30 = vector.broadcast %2 : vector<1x15xf32> to vector<16x15xf32>
    %31 = arith.addf %29, %30 : vector<16x15xf32>
    %c0_15 = arith.constant 0 : index
    %c0_16 = arith.constant 0 : index
    %c0_17 = arith.constant 0 : index
    %c0_18 = arith.constant 0 : index
    %32 = vector.load %arg1[%c0_15, %c0_16, %c0_17, %c0_18] : memref<1x8x2x32xbf16, #tpu.memory_space<vmem>>, vector<1x8x2x32xbf16>
    %33 = vector.shape_cast %32 : vector<1x8x2x32xbf16> to vector<8x2x32xbf16>
    %34 = vector.shape_cast %33 : vector<8x2x32xbf16> to vector<16x32xbf16>
    %c0_19 = arith.constant 0 : index
    %c0_20 = arith.constant 0 : index
    %35 = vector.load %arg4[%c0_19, %c0_20] : memref<47x256xbf16, #tpu.memory_space<vmem>>, vector<32x256xbf16>
    %cst_21 = arith.constant dense<0.000000e+00> : vector<16x256xf32>
    %36 = tpu.matmul %34, %35, %cst_21 {dimension_numbers = #tpu.dot_dimension_numbers<[1], [0], [0], [1], [0, 0, 1, 1], [], []>} : vector<16x32xbf16>, vector<32x256xbf16>, vector<16x256xf32> -> vector<16x256xf32>
    %37 = arith.truncf %31 : vector<16x15xf32> to vector<16x15xbf16>
    %c32 = arith.constant 32 : index
    %c0_22 = arith.constant 0 : index
    %38 = vector.load %arg4[%c32, %c0_22] : memref<47x256xbf16, #tpu.memory_space<vmem>>, vector<15x256xbf16>
    %cst_23 = arith.constant dense<0.000000e+00> : vector<16x256xf32>
    %39 = tpu.matmul %37, %38, %cst_23 {dimension_numbers = #tpu.dot_dimension_numbers<[1], [0], [0], [1], [0, 0, 1, 1], [], []>} : vector<16x15xbf16>, vector<15x256xbf16>, vector<16x256xf32> -> vector<16x256xf32>
    %40 = arith.addf %36, %39 : vector<16x256xf32>
    %41 = vector.broadcast %0 : vector<1x256xf32> to vector<16x256xf32>
    %42 = arith.addf %40, %41 : vector<16x256xf32>
    %c0_24 = arith.constant 0 : index
    %c0_25 = arith.constant 0 : index
    %43 = vector.load %arg5[%c0_24, %c0_25] : memref<32x256xbf16, #tpu.memory_space<vmem>>, vector<32x256xbf16>
    %c0_26 = arith.constant 0 : index
    %c0_27 = arith.constant 0 : index
    %c0_28 = arith.constant 0 : index
    %c0_29 = arith.constant 0 : index
    %44 = vector.load %arg3[%c0_26, %c0_27, %c0_28, %c0_29] : memref<1x8x4x1xf32, #tpu.memory_space<vmem>>, vector<1x8x4x1xf32>
    %45 = vector.shape_cast %44 : vector<1x8x4x1xf32> to vector<8x4x1xf32>
    %46 = tpu.iota {dimensions = array<i32: 0>} : vector<4x1xi32>
    %c2_i32 = arith.constant 2 : i32
    %47 = vector.broadcast %c2_i32 : i32 to vector<4x1xi32>
    %48 = arith.cmpi slt, %46, %47 : vector<4x1xi32>
    %cst_30 = arith.constant 0.000000e+00 : f32
    %49 = vector.broadcast %cst_30 : f32 to vector<4x32xf32>
    %cst_31 = arith.constant 0.000000e+00 : f32
    %50 = vector.broadcast %cst_31 : f32 to vector<4x32xf32>
    %51 = vector.extract_strided_slice %42 {offsets = [0, 0], sizes = [2, 128], strides = [1, 1]} : vector<16x256xf32> to vector<2x128xf32>
    %52 = vector.extract_strided_slice %42 {offsets = [14, 128], sizes = [2, 128], strides = [1, 1]} : vector<16x256xf32> to vector<2x128xf32>
    %53 = tpu.concatenate %51, %52 in 0 : vector<2x128xf32>, vector<2x128xf32> -> vector<4x128xf32>
    %54 = arith.truncf %49 : vector<4x32xf32> to vector<4x32xbf16>
    %cst_32 = arith.constant dense<0.000000e+00> : vector<4x256xf32>
    %55 = tpu.matmul %54, %43, %cst_32 {dimension_numbers = #tpu.dot_dimension_numbers<[1], [0], [0], [1], [0, 0, 1, 1], [], []>} : vector<4x32xbf16>, vector<32x256xbf16>, vector<4x256xf32> -> vector<4x256xf32>
    %56 = vector.extract_strided_slice %55 {offsets = [0, 0], sizes = [4, 128], strides = [1, 1]} : vector<4x256xf32> to vector<4x128xf32>
    %57 = vector.extract_strided_slice %55 {offsets = [0, 128], sizes = [4, 128], strides = [1, 1]} : vector<4x256xf32> to vector<4x128xf32>
    %58 = vector.shape_cast %48 : vector<4x1xi1> to vector<4x1xi1>
    %59 = vector.broadcast %58 : vector<4x1xi1> to vector<4x128xi1>
    %60 = arith.select %59, %56, %57 : vector<4x128xi1>, vector<4x128xf32>
    %61 = arith.addf %53, %60 : vector<4x128xf32>
    %62 = arith.negf %61 : vector<4x128xf32>
    %63 = math.exp %62 : vector<4x128xf32>
    %cst_33 = arith.constant 1.000000e+00 : f32
    %64 = vector.broadcast %cst_33 : f32 to vector<4x128xf32>
    %65 = arith.addf %64, %63 : vector<4x128xf32>
    %66 = arith.divf %64, %65 : vector<4x128xf32>
    %67 = math.tanh %61 : vector<4x128xf32>
    %68 = vector.extract_strided_slice %66 {offsets = [0, 0], sizes = [4, 32], strides = [1, 1]} : vector<4x128xf32> to vector<4x32xf32>
    %69 = vector.extract_strided_slice %66 {offsets = [0, 32], sizes = [4, 32], strides = [1, 1]} : vector<4x128xf32> to vector<4x32xf32>
    %70 = vector.extract_strided_slice %67 {offsets = [0, 64], sizes = [4, 32], strides = [1, 1]} : vector<4x128xf32> to vector<4x32xf32>
    %71 = vector.extract_strided_slice %66 {offsets = [0, 96], sizes = [4, 32], strides = [1, 1]} : vector<4x128xf32> to vector<4x32xf32>
    %72 = arith.mulf %69, %50 : vector<4x32xf32>
    %73 = arith.mulf %68, %70 : vector<4x32xf32>
    %74 = arith.addf %72, %73 : vector<4x32xf32>
    %75 = math.tanh %74 : vector<4x32xf32>
    %76 = arith.mulf %71, %75 : vector<4x32xf32>
    %77 = vector.extract_strided_slice %45 {offsets = [0, 0, 0], sizes = [1, 4, 1], strides = [1, 1, 1]} : vector<8x4x1xf32> to vector<1x4x1xf32>
    %78 = vector.shape_cast %77 : vector<1x4x1xf32> to vector<4x1xf32>
    %79 = vector.broadcast %78 : vector<4x1xf32> to vector<4x32xf32>
    %80 = arith.mulf %79, %76 : vector<4x32xf32>
    %cst_34 = arith.constant 1.000000e+00 : f32
    %81 = vector.broadcast %cst_34 : f32 to vector<4x1xf32>
    %82 = arith.subf %81, %78 : vector<4x1xf32>
    %83 = vector.broadcast %82 : vector<4x1xf32> to vector<4x32xf32>
    %84 = arith.mulf %83, %49 : vector<4x32xf32>
    %85 = arith.addf %80, %84 : vector<4x32xf32>
    %86 = vector.broadcast %78 : vector<4x1xf32> to vector<4x32xf32>
    %87 = arith.mulf %86, %74 : vector<4x32xf32>
    %cst_35 = arith.constant 1.000000e+00 : f32
    %88 = vector.broadcast %cst_35 : f32 to vector<4x1xf32>
    %89 = arith.subf %88, %78 : vector<4x1xf32>
    %90 = vector.broadcast %89 : vector<4x1xf32> to vector<4x32xf32>
    %91 = arith.mulf %90, %50 : vector<4x32xf32>
    %92 = arith.addf %87, %91 : vector<4x32xf32>
    %93 = vector.extract_strided_slice %80 {offsets = [0, 0], sizes = [2, 32], strides = [1, 1]} : vector<4x32xf32> to vector<2x32xf32>
    %94 = vector.extract_strided_slice %80 {offsets = [2, 0], sizes = [2, 32], strides = [1, 1]} : vector<4x32xf32> to vector<2x32xf32>
    %95 = vector.extract_strided_slice %42 {offsets = [2, 0], sizes = [2, 128], strides = [1, 1]} : vector<16x256xf32> to vector<2x128xf32>
    %96 = vector.extract_strided_slice %42 {offsets = [12, 128], sizes = [2, 128], strides = [1, 1]} : vector<16x256xf32> to vector<2x128xf32>
    %97 = tpu.concatenate %95, %96 in 0 : vector<2x128xf32>, vector<2x128xf32> -> vector<4x128xf32>
    %98 = arith.truncf %85 : vector<4x32xf32> to vector<4x32xbf16>
    %cst_36 = arith.constant dense<0.000000e+00> : vector<4x256xf32>
    %99 = tpu.matmul %98, %43, %cst_36 {dimension_numbers = #tpu.dot_dimension_numbers<[1], [0], [0], [1], [0, 0, 1, 1], [], []>} : vector<4x32xbf16>, vector<32x256xbf16>, vector<4x256xf32> -> vector<4x256xf32>
    %100 = vector.extract_strided_slice %99 {offsets = [0, 0], sizes = [4, 128], strides = [1, 1]} : vector<4x256xf32> to vector<4x128xf32>
    %101 = vector.extract_strided_slice %99 {offsets = [0, 128], sizes = [4, 128], strides = [1, 1]} : vector<4x256xf32> to vector<4x128xf32>
    %102 = vector.shape_cast %48 : vector<4x1xi1> to vector<4x1xi1>
    %103 = vector.broadcast %102 : vector<4x1xi1> to vector<4x128xi1>
    %104 = arith.select %103, %100, %101 : vector<4x128xi1>, vector<4x128xf32>
    %105 = arith.addf %97, %104 : vector<4x128xf32>
    %106 = arith.negf %105 : vector<4x128xf32>
    %107 = math.exp %106 : vector<4x128xf32>
    %cst_37 = arith.constant 1.000000e+00 : f32
    %108 = vector.broadcast %cst_37 : f32 to vector<4x128xf32>
    %109 = arith.addf %108, %107 : vector<4x128xf32>
    %110 = arith.divf %108, %109 : vector<4x128xf32>
    %111 = math.tanh %105 : vector<4x128xf32>
    %112 = vector.extract_strided_slice %110 {offsets = [0, 0], sizes = [4, 32], strides = [1, 1]} : vector<4x128xf32> to vector<4x32xf32>
    %113 = vector.extract_strided_slice %110 {offsets = [0, 32], sizes = [4, 32], strides = [1, 1]} : vector<4x128xf32> to vector<4x32xf32>
    %114 = vector.extract_strided_slice %111 {offsets = [0, 64], sizes = [4, 32], strides = [1, 1]} : vector<4x128xf32> to vector<4x32xf32>
    %115 = vector.extract_strided_slice %110 {offsets = [0, 96], sizes = [4, 32], strides = [1, 1]} : vector<4x128xf32> to vector<4x32xf32>
    %116 = arith.mulf %113, %92 : vector<4x32xf32>
    %117 = arith.mulf %112, %114 : vector<4x32xf32>
    %118 = arith.addf %116, %117 : vector<4x32xf32>
    %119 = math.tanh %118 : vector<4x32xf32>
    %120 = arith.mulf %115, %119 : vector<4x32xf32>
    %121 = vector.extract_strided_slice %45 {offsets = [1, 0, 0], sizes = [1, 4, 1], strides = [1, 1, 1]} : vector<8x4x1xf32> to vector<1x4x1xf32>
    %122 = vector.shape_cast %121 : vector<1x4x1xf32> to vector<4x1xf32>
    %123 = vector.broadcast %122 : vector<4x1xf32> to vector<4x32xf32>
    %124 = arith.mulf %123, %120 : vector<4x32xf32>
    %cst_38 = arith.constant 1.000000e+00 : f32
    %125 = vector.broadcast %cst_38 : f32 to vector<4x1xf32>
    %126 = arith.subf %125, %122 : vector<4x1xf32>
    %127 = vector.broadcast %126 : vector<4x1xf32> to vector<4x32xf32>
    %128 = arith.mulf %127, %85 : vector<4x32xf32>
    %129 = arith.addf %124, %128 : vector<4x32xf32>
    %130 = vector.broadcast %122 : vector<4x1xf32> to vector<4x32xf32>
    %131 = arith.mulf %130, %118 : vector<4x32xf32>
    %cst_39 = arith.constant 1.000000e+00 : f32
    %132 = vector.broadcast %cst_39 : f32 to vector<4x1xf32>
    %133 = arith.subf %132, %122 : vector<4x1xf32>
    %134 = vector.broadcast %133 : vector<4x1xf32> to vector<4x32xf32>
    %135 = arith.mulf %134, %92 : vector<4x32xf32>
    %136 = arith.addf %131, %135 : vector<4x32xf32>
    %137 = vector.extract_strided_slice %124 {offsets = [0, 0], sizes = [2, 32], strides = [1, 1]} : vector<4x32xf32> to vector<2x32xf32>
    %138 = vector.extract_strided_slice %124 {offsets = [2, 0], sizes = [2, 32], strides = [1, 1]} : vector<4x32xf32> to vector<2x32xf32>
    %139 = vector.extract_strided_slice %42 {offsets = [4, 0], sizes = [2, 128], strides = [1, 1]} : vector<16x256xf32> to vector<2x128xf32>
    %140 = vector.extract_strided_slice %42 {offsets = [10, 128], sizes = [2, 128], strides = [1, 1]} : vector<16x256xf32> to vector<2x128xf32>
    %141 = tpu.concatenate %139, %140 in 0 : vector<2x128xf32>, vector<2x128xf32> -> vector<4x128xf32>
    %142 = arith.truncf %129 : vector<4x32xf32> to vector<4x32xbf16>
    %cst_40 = arith.constant dense<0.000000e+00> : vector<4x256xf32>
    %143 = tpu.matmul %142, %43, %cst_40 {dimension_numbers = #tpu.dot_dimension_numbers<[1], [0], [0], [1], [0, 0, 1, 1], [], []>} : vector<4x32xbf16>, vector<32x256xbf16>, vector<4x256xf32> -> vector<4x256xf32>
    %144 = vector.extract_strided_slice %143 {offsets = [0, 0], sizes = [4, 128], strides = [1, 1]} : vector<4x256xf32> to vector<4x128xf32>
    %145 = vector.extract_strided_slice %143 {offsets = [0, 128], sizes = [4, 128], strides = [1, 1]} : vector<4x256xf32> to vector<4x128xf32>
    %146 = vector.shape_cast %48 : vector<4x1xi1> to vector<4x1xi1>
    %147 = vector.broadcast %146 : vector<4x1xi1> to vector<4x128xi1>
    %148 = arith.select %147, %144, %145 : vector<4x128xi1>, vector<4x128xf32>
    %149 = arith.addf %141, %148 : vector<4x128xf32>
    %150 = arith.negf %149 : vector<4x128xf32>
    %151 = math.exp %150 : vector<4x128xf32>
    %cst_41 = arith.constant 1.000000e+00 : f32
    %152 = vector.broadcast %cst_41 : f32 to vector<4x128xf32>
    %153 = arith.addf %152, %151 : vector<4x128xf32>
    %154 = arith.divf %152, %153 : vector<4x128xf32>
    %155 = math.tanh %149 : vector<4x128xf32>
    %156 = vector.extract_strided_slice %154 {offsets = [0, 0], sizes = [4, 32], strides = [1, 1]} : vector<4x128xf32> to vector<4x32xf32>
    %157 = vector.extract_strided_slice %154 {offsets = [0, 32], sizes = [4, 32], strides = [1, 1]} : vector<4x128xf32> to vector<4x32xf32>
    %158 = vector.extract_strided_slice %155 {offsets = [0, 64], sizes = [4, 32], strides = [1, 1]} : vector<4x128xf32> to vector<4x32xf32>
    %159 = vector.extract_strided_slice %154 {offsets = [0, 96], sizes = [4, 32], strides = [1, 1]} : vector<4x128xf32> to vector<4x32xf32>
    %160 = arith.mulf %157, %136 : vector<4x32xf32>
    %161 = arith.mulf %156, %158 : vector<4x32xf32>
    %162 = arith.addf %160, %161 : vector<4x32xf32>
    %163 = math.tanh %162 : vector<4x32xf32>
    %164 = arith.mulf %159, %163 : vector<4x32xf32>
    %165 = vector.extract_strided_slice %45 {offsets = [2, 0, 0], sizes = [1, 4, 1], strides = [1, 1, 1]} : vector<8x4x1xf32> to vector<1x4x1xf32>
    %166 = vector.shape_cast %165 : vector<1x4x1xf32> to vector<4x1xf32>
    %167 = vector.broadcast %166 : vector<4x1xf32> to vector<4x32xf32>
    %168 = arith.mulf %167, %164 : vector<4x32xf32>
    %cst_42 = arith.constant 1.000000e+00 : f32
    %169 = vector.broadcast %cst_42 : f32 to vector<4x1xf32>
    %170 = arith.subf %169, %166 : vector<4x1xf32>
    %171 = vector.broadcast %170 : vector<4x1xf32> to vector<4x32xf32>
    %172 = arith.mulf %171, %129 : vector<4x32xf32>
    %173 = arith.addf %168, %172 : vector<4x32xf32>
    %174 = vector.broadcast %166 : vector<4x1xf32> to vector<4x32xf32>
    %175 = arith.mulf %174, %162 : vector<4x32xf32>
    %cst_43 = arith.constant 1.000000e+00 : f32
    %176 = vector.broadcast %cst_43 : f32 to vector<4x1xf32>
    %177 = arith.subf %176, %166 : vector<4x1xf32>
    %178 = vector.broadcast %177 : vector<4x1xf32> to vector<4x32xf32>
    %179 = arith.mulf %178, %136 : vector<4x32xf32>
    %180 = arith.addf %175, %179 : vector<4x32xf32>
    %181 = vector.extract_strided_slice %168 {offsets = [0, 0], sizes = [2, 32], strides = [1, 1]} : vector<4x32xf32> to vector<2x32xf32>
    %182 = vector.extract_strided_slice %168 {offsets = [2, 0], sizes = [2, 32], strides = [1, 1]} : vector<4x32xf32> to vector<2x32xf32>
    %183 = vector.extract_strided_slice %42 {offsets = [6, 0], sizes = [2, 128], strides = [1, 1]} : vector<16x256xf32> to vector<2x128xf32>
    %184 = vector.extract_strided_slice %42 {offsets = [8, 128], sizes = [2, 128], strides = [1, 1]} : vector<16x256xf32> to vector<2x128xf32>
    %185 = tpu.concatenate %183, %184 in 0 : vector<2x128xf32>, vector<2x128xf32> -> vector<4x128xf32>
    %186 = arith.truncf %173 : vector<4x32xf32> to vector<4x32xbf16>
    %cst_44 = arith.constant dense<0.000000e+00> : vector<4x256xf32>
    %187 = tpu.matmul %186, %43, %cst_44 {dimension_numbers = #tpu.dot_dimension_numbers<[1], [0], [0], [1], [0, 0, 1, 1], [], []>} : vector<4x32xbf16>, vector<32x256xbf16>, vector<4x256xf32> -> vector<4x256xf32>
    %188 = vector.extract_strided_slice %187 {offsets = [0, 0], sizes = [4, 128], strides = [1, 1]} : vector<4x256xf32> to vector<4x128xf32>
    %189 = vector.extract_strided_slice %187 {offsets = [0, 128], sizes = [4, 128], strides = [1, 1]} : vector<4x256xf32> to vector<4x128xf32>
    %190 = vector.shape_cast %48 : vector<4x1xi1> to vector<4x1xi1>
    %191 = vector.broadcast %190 : vector<4x1xi1> to vector<4x128xi1>
    %192 = arith.select %191, %188, %189 : vector<4x128xi1>, vector<4x128xf32>
    %193 = arith.addf %185, %192 : vector<4x128xf32>
    %194 = arith.negf %193 : vector<4x128xf32>
    %195 = math.exp %194 : vector<4x128xf32>
    %cst_45 = arith.constant 1.000000e+00 : f32
    %196 = vector.broadcast %cst_45 : f32 to vector<4x128xf32>
    %197 = arith.addf %196, %195 : vector<4x128xf32>
    %198 = arith.divf %196, %197 : vector<4x128xf32>
    %199 = math.tanh %193 : vector<4x128xf32>
    %200 = vector.extract_strided_slice %198 {offsets = [0, 0], sizes = [4, 32], strides = [1, 1]} : vector<4x128xf32> to vector<4x32xf32>
    %201 = vector.extract_strided_slice %198 {offsets = [0, 32], sizes = [4, 32], strides = [1, 1]} : vector<4x128xf32> to vector<4x32xf32>
    %202 = vector.extract_strided_slice %199 {offsets = [0, 64], sizes = [4, 32], strides = [1, 1]} : vector<4x128xf32> to vector<4x32xf32>
    %203 = vector.extract_strided_slice %198 {offsets = [0, 96], sizes = [4, 32], strides = [1, 1]} : vector<4x128xf32> to vector<4x32xf32>
    %204 = arith.mulf %201, %180 : vector<4x32xf32>
    %205 = arith.mulf %200, %202 : vector<4x32xf32>
    %206 = arith.addf %204, %205 : vector<4x32xf32>
    %207 = math.tanh %206 : vector<4x32xf32>
    %208 = arith.mulf %203, %207 : vector<4x32xf32>
    %209 = vector.extract_strided_slice %45 {offsets = [3, 0, 0], sizes = [1, 4, 1], strides = [1, 1, 1]} : vector<8x4x1xf32> to vector<1x4x1xf32>
    %210 = vector.shape_cast %209 : vector<1x4x1xf32> to vector<4x1xf32>
    %211 = vector.broadcast %210 : vector<4x1xf32> to vector<4x32xf32>
    %212 = arith.mulf %211, %208 : vector<4x32xf32>
    %cst_46 = arith.constant 1.000000e+00 : f32
    %213 = vector.broadcast %cst_46 : f32 to vector<4x1xf32>
    %214 = arith.subf %213, %210 : vector<4x1xf32>
    %215 = vector.broadcast %214 : vector<4x1xf32> to vector<4x32xf32>
    %216 = arith.mulf %215, %173 : vector<4x32xf32>
    %217 = arith.addf %212, %216 : vector<4x32xf32>
    %218 = vector.broadcast %210 : vector<4x1xf32> to vector<4x32xf32>
    %219 = arith.mulf %218, %206 : vector<4x32xf32>
    %cst_47 = arith.constant 1.000000e+00 : f32
    %220 = vector.broadcast %cst_47 : f32 to vector<4x1xf32>
    %221 = arith.subf %220, %210 : vector<4x1xf32>
    %222 = vector.broadcast %221 : vector<4x1xf32> to vector<4x32xf32>
    %223 = arith.mulf %222, %180 : vector<4x32xf32>
    %224 = arith.addf %219, %223 : vector<4x32xf32>
    %225 = vector.extract_strided_slice %212 {offsets = [0, 0], sizes = [2, 32], strides = [1, 1]} : vector<4x32xf32> to vector<2x32xf32>
    %226 = vector.extract_strided_slice %212 {offsets = [2, 0], sizes = [2, 32], strides = [1, 1]} : vector<4x32xf32> to vector<2x32xf32>
    %227 = vector.extract_strided_slice %42 {offsets = [8, 0], sizes = [2, 128], strides = [1, 1]} : vector<16x256xf32> to vector<2x128xf32>
    %228 = vector.extract_strided_slice %42 {offsets = [6, 128], sizes = [2, 128], strides = [1, 1]} : vector<16x256xf32> to vector<2x128xf32>
    %229 = tpu.concatenate %227, %228 in 0 : vector<2x128xf32>, vector<2x128xf32> -> vector<4x128xf32>
    %230 = arith.truncf %217 : vector<4x32xf32> to vector<4x32xbf16>
    %cst_48 = arith.constant dense<0.000000e+00> : vector<4x256xf32>
    %231 = tpu.matmul %230, %43, %cst_48 {dimension_numbers = #tpu.dot_dimension_numbers<[1], [0], [0], [1], [0, 0, 1, 1], [], []>} : vector<4x32xbf16>, vector<32x256xbf16>, vector<4x256xf32> -> vector<4x256xf32>
    %232 = vector.extract_strided_slice %231 {offsets = [0, 0], sizes = [4, 128], strides = [1, 1]} : vector<4x256xf32> to vector<4x128xf32>
    %233 = vector.extract_strided_slice %231 {offsets = [0, 128], sizes = [4, 128], strides = [1, 1]} : vector<4x256xf32> to vector<4x128xf32>
    %234 = vector.shape_cast %48 : vector<4x1xi1> to vector<4x1xi1>
    %235 = vector.broadcast %234 : vector<4x1xi1> to vector<4x128xi1>
    %236 = arith.select %235, %232, %233 : vector<4x128xi1>, vector<4x128xf32>
    %237 = arith.addf %229, %236 : vector<4x128xf32>
    %238 = arith.negf %237 : vector<4x128xf32>
    %239 = math.exp %238 : vector<4x128xf32>
    %cst_49 = arith.constant 1.000000e+00 : f32
    %240 = vector.broadcast %cst_49 : f32 to vector<4x128xf32>
    %241 = arith.addf %240, %239 : vector<4x128xf32>
    %242 = arith.divf %240, %241 : vector<4x128xf32>
    %243 = math.tanh %237 : vector<4x128xf32>
    %244 = vector.extract_strided_slice %242 {offsets = [0, 0], sizes = [4, 32], strides = [1, 1]} : vector<4x128xf32> to vector<4x32xf32>
    %245 = vector.extract_strided_slice %242 {offsets = [0, 32], sizes = [4, 32], strides = [1, 1]} : vector<4x128xf32> to vector<4x32xf32>
    %246 = vector.extract_strided_slice %243 {offsets = [0, 64], sizes = [4, 32], strides = [1, 1]} : vector<4x128xf32> to vector<4x32xf32>
    %247 = vector.extract_strided_slice %242 {offsets = [0, 96], sizes = [4, 32], strides = [1, 1]} : vector<4x128xf32> to vector<4x32xf32>
    %248 = arith.mulf %245, %224 : vector<4x32xf32>
    %249 = arith.mulf %244, %246 : vector<4x32xf32>
    %250 = arith.addf %248, %249 : vector<4x32xf32>
    %251 = math.tanh %250 : vector<4x32xf32>
    %252 = arith.mulf %247, %251 : vector<4x32xf32>
    %253 = vector.extract_strided_slice %45 {offsets = [4, 0, 0], sizes = [1, 4, 1], strides = [1, 1, 1]} : vector<8x4x1xf32> to vector<1x4x1xf32>
    %254 = vector.shape_cast %253 : vector<1x4x1xf32> to vector<4x1xf32>
    %255 = vector.broadcast %254 : vector<4x1xf32> to vector<4x32xf32>
    %256 = arith.mulf %255, %252 : vector<4x32xf32>
    %cst_50 = arith.constant 1.000000e+00 : f32
    %257 = vector.broadcast %cst_50 : f32 to vector<4x1xf32>
    %258 = arith.subf %257, %254 : vector<4x1xf32>
    %259 = vector.broadcast %258 : vector<4x1xf32> to vector<4x32xf32>
    %260 = arith.mulf %259, %217 : vector<4x32xf32>
    %261 = arith.addf %256, %260 : vector<4x32xf32>
    %262 = vector.broadcast %254 : vector<4x1xf32> to vector<4x32xf32>
    %263 = arith.mulf %262, %250 : vector<4x32xf32>
    %cst_51 = arith.constant 1.000000e+00 : f32
    %264 = vector.broadcast %cst_51 : f32 to vector<4x1xf32>
    %265 = arith.subf %264, %254 : vector<4x1xf32>
    %266 = vector.broadcast %265 : vector<4x1xf32> to vector<4x32xf32>
    %267 = arith.mulf %266, %224 : vector<4x32xf32>
    %268 = arith.addf %263, %267 : vector<4x32xf32>
    %269 = vector.extract_strided_slice %256 {offsets = [0, 0], sizes = [2, 32], strides = [1, 1]} : vector<4x32xf32> to vector<2x32xf32>
    %270 = vector.extract_strided_slice %256 {offsets = [2, 0], sizes = [2, 32], strides = [1, 1]} : vector<4x32xf32> to vector<2x32xf32>
    %271 = vector.extract_strided_slice %42 {offsets = [10, 0], sizes = [2, 128], strides = [1, 1]} : vector<16x256xf32> to vector<2x128xf32>
    %272 = vector.extract_strided_slice %42 {offsets = [4, 128], sizes = [2, 128], strides = [1, 1]} : vector<16x256xf32> to vector<2x128xf32>
    %273 = tpu.concatenate %271, %272 in 0 : vector<2x128xf32>, vector<2x128xf32> -> vector<4x128xf32>
    %274 = arith.truncf %261 : vector<4x32xf32> to vector<4x32xbf16>
    %cst_52 = arith.constant dense<0.000000e+00> : vector<4x256xf32>
    %275 = tpu.matmul %274, %43, %cst_52 {dimension_numbers = #tpu.dot_dimension_numbers<[1], [0], [0], [1], [0, 0, 1, 1], [], []>} : vector<4x32xbf16>, vector<32x256xbf16>, vector<4x256xf32> -> vector<4x256xf32>
    %276 = vector.extract_strided_slice %275 {offsets = [0, 0], sizes = [4, 128], strides = [1, 1]} : vector<4x256xf32> to vector<4x128xf32>
    %277 = vector.extract_strided_slice %275 {offsets = [0, 128], sizes = [4, 128], strides = [1, 1]} : vector<4x256xf32> to vector<4x128xf32>
    %278 = vector.shape_cast %48 : vector<4x1xi1> to vector<4x1xi1>
    %279 = vector.broadcast %278 : vector<4x1xi1> to vector<4x128xi1>
    %280 = arith.select %279, %276, %277 : vector<4x128xi1>, vector<4x128xf32>
    %281 = arith.addf %273, %280 : vector<4x128xf32>
    %282 = arith.negf %281 : vector<4x128xf32>
    %283 = math.exp %282 : vector<4x128xf32>
    %cst_53 = arith.constant 1.000000e+00 : f32
    %284 = vector.broadcast %cst_53 : f32 to vector<4x128xf32>
    %285 = arith.addf %284, %283 : vector<4x128xf32>
    %286 = arith.divf %284, %285 : vector<4x128xf32>
    %287 = math.tanh %281 : vector<4x128xf32>
    %288 = vector.extract_strided_slice %286 {offsets = [0, 0], sizes = [4, 32], strides = [1, 1]} : vector<4x128xf32> to vector<4x32xf32>
    %289 = vector.extract_strided_slice %286 {offsets = [0, 32], sizes = [4, 32], strides = [1, 1]} : vector<4x128xf32> to vector<4x32xf32>
    %290 = vector.extract_strided_slice %287 {offsets = [0, 64], sizes = [4, 32], strides = [1, 1]} : vector<4x128xf32> to vector<4x32xf32>
    %291 = vector.extract_strided_slice %286 {offsets = [0, 96], sizes = [4, 32], strides = [1, 1]} : vector<4x128xf32> to vector<4x32xf32>
    %292 = arith.mulf %289, %268 : vector<4x32xf32>
    %293 = arith.mulf %288, %290 : vector<4x32xf32>
    %294 = arith.addf %292, %293 : vector<4x32xf32>
    %295 = math.tanh %294 : vector<4x32xf32>
    %296 = arith.mulf %291, %295 : vector<4x32xf32>
    %297 = vector.extract_strided_slice %45 {offsets = [5, 0, 0], sizes = [1, 4, 1], strides = [1, 1, 1]} : vector<8x4x1xf32> to vector<1x4x1xf32>
    %298 = vector.shape_cast %297 : vector<1x4x1xf32> to vector<4x1xf32>
    %299 = vector.broadcast %298 : vector<4x1xf32> to vector<4x32xf32>
    %300 = arith.mulf %299, %296 : vector<4x32xf32>
    %cst_54 = arith.constant 1.000000e+00 : f32
    %301 = vector.broadcast %cst_54 : f32 to vector<4x1xf32>
    %302 = arith.subf %301, %298 : vector<4x1xf32>
    %303 = vector.broadcast %302 : vector<4x1xf32> to vector<4x32xf32>
    %304 = arith.mulf %303, %261 : vector<4x32xf32>
    %305 = arith.addf %300, %304 : vector<4x32xf32>
    %306 = vector.broadcast %298 : vector<4x1xf32> to vector<4x32xf32>
    %307 = arith.mulf %306, %294 : vector<4x32xf32>
    %cst_55 = arith.constant 1.000000e+00 : f32
    %308 = vector.broadcast %cst_55 : f32 to vector<4x1xf32>
    %309 = arith.subf %308, %298 : vector<4x1xf32>
    %310 = vector.broadcast %309 : vector<4x1xf32> to vector<4x32xf32>
    %311 = arith.mulf %310, %268 : vector<4x32xf32>
    %312 = arith.addf %307, %311 : vector<4x32xf32>
    %313 = vector.extract_strided_slice %300 {offsets = [0, 0], sizes = [2, 32], strides = [1, 1]} : vector<4x32xf32> to vector<2x32xf32>
    %314 = vector.extract_strided_slice %300 {offsets = [2, 0], sizes = [2, 32], strides = [1, 1]} : vector<4x32xf32> to vector<2x32xf32>
    %315 = vector.extract_strided_slice %42 {offsets = [12, 0], sizes = [2, 128], strides = [1, 1]} : vector<16x256xf32> to vector<2x128xf32>
    %316 = vector.extract_strided_slice %42 {offsets = [2, 128], sizes = [2, 128], strides = [1, 1]} : vector<16x256xf32> to vector<2x128xf32>
    %317 = tpu.concatenate %315, %316 in 0 : vector<2x128xf32>, vector<2x128xf32> -> vector<4x128xf32>
    %318 = arith.truncf %305 : vector<4x32xf32> to vector<4x32xbf16>
    %cst_56 = arith.constant dense<0.000000e+00> : vector<4x256xf32>
    %319 = tpu.matmul %318, %43, %cst_56 {dimension_numbers = #tpu.dot_dimension_numbers<[1], [0], [0], [1], [0, 0, 1, 1], [], []>} : vector<4x32xbf16>, vector<32x256xbf16>, vector<4x256xf32> -> vector<4x256xf32>
    %320 = vector.extract_strided_slice %319 {offsets = [0, 0], sizes = [4, 128], strides = [1, 1]} : vector<4x256xf32> to vector<4x128xf32>
    %321 = vector.extract_strided_slice %319 {offsets = [0, 128], sizes = [4, 128], strides = [1, 1]} : vector<4x256xf32> to vector<4x128xf32>
    %322 = vector.shape_cast %48 : vector<4x1xi1> to vector<4x1xi1>
    %323 = vector.broadcast %322 : vector<4x1xi1> to vector<4x128xi1>
    %324 = arith.select %323, %320, %321 : vector<4x128xi1>, vector<4x128xf32>
    %325 = arith.addf %317, %324 : vector<4x128xf32>
    %326 = arith.negf %325 : vector<4x128xf32>
    %327 = math.exp %326 : vector<4x128xf32>
    %cst_57 = arith.constant 1.000000e+00 : f32
    %328 = vector.broadcast %cst_57 : f32 to vector<4x128xf32>
    %329 = arith.addf %328, %327 : vector<4x128xf32>
    %330 = arith.divf %328, %329 : vector<4x128xf32>
    %331 = math.tanh %325 : vector<4x128xf32>
    %332 = vector.extract_strided_slice %330 {offsets = [0, 0], sizes = [4, 32], strides = [1, 1]} : vector<4x128xf32> to vector<4x32xf32>
    %333 = vector.extract_strided_slice %330 {offsets = [0, 32], sizes = [4, 32], strides = [1, 1]} : vector<4x128xf32> to vector<4x32xf32>
    %334 = vector.extract_strided_slice %331 {offsets = [0, 64], sizes = [4, 32], strides = [1, 1]} : vector<4x128xf32> to vector<4x32xf32>
    %335 = vector.extract_strided_slice %330 {offsets = [0, 96], sizes = [4, 32], strides = [1, 1]} : vector<4x128xf32> to vector<4x32xf32>
    %336 = arith.mulf %333, %312 : vector<4x32xf32>
    %337 = arith.mulf %332, %334 : vector<4x32xf32>
    %338 = arith.addf %336, %337 : vector<4x32xf32>
    %339 = math.tanh %338 : vector<4x32xf32>
    %340 = arith.mulf %335, %339 : vector<4x32xf32>
    %341 = vector.extract_strided_slice %45 {offsets = [6, 0, 0], sizes = [1, 4, 1], strides = [1, 1, 1]} : vector<8x4x1xf32> to vector<1x4x1xf32>
    %342 = vector.shape_cast %341 : vector<1x4x1xf32> to vector<4x1xf32>
    %343 = vector.broadcast %342 : vector<4x1xf32> to vector<4x32xf32>
    %344 = arith.mulf %343, %340 : vector<4x32xf32>
    %cst_58 = arith.constant 1.000000e+00 : f32
    %345 = vector.broadcast %cst_58 : f32 to vector<4x1xf32>
    %346 = arith.subf %345, %342 : vector<4x1xf32>
    %347 = vector.broadcast %346 : vector<4x1xf32> to vector<4x32xf32>
    %348 = arith.mulf %347, %305 : vector<4x32xf32>
    %349 = arith.addf %344, %348 : vector<4x32xf32>
    %350 = vector.broadcast %342 : vector<4x1xf32> to vector<4x32xf32>
    %351 = arith.mulf %350, %338 : vector<4x32xf32>
    %cst_59 = arith.constant 1.000000e+00 : f32
    %352 = vector.broadcast %cst_59 : f32 to vector<4x1xf32>
    %353 = arith.subf %352, %342 : vector<4x1xf32>
    %354 = vector.broadcast %353 : vector<4x1xf32> to vector<4x32xf32>
    %355 = arith.mulf %354, %312 : vector<4x32xf32>
    %356 = arith.addf %351, %355 : vector<4x32xf32>
    %357 = vector.extract_strided_slice %344 {offsets = [0, 0], sizes = [2, 32], strides = [1, 1]} : vector<4x32xf32> to vector<2x32xf32>
    %358 = vector.extract_strided_slice %344 {offsets = [2, 0], sizes = [2, 32], strides = [1, 1]} : vector<4x32xf32> to vector<2x32xf32>
    %359 = vector.extract_strided_slice %42 {offsets = [14, 0], sizes = [2, 128], strides = [1, 1]} : vector<16x256xf32> to vector<2x128xf32>
    %360 = vector.extract_strided_slice %42 {offsets = [0, 128], sizes = [2, 128], strides = [1, 1]} : vector<16x256xf32> to vector<2x128xf32>
    %361 = tpu.concatenate %359, %360 in 0 : vector<2x128xf32>, vector<2x128xf32> -> vector<4x128xf32>
    %362 = arith.truncf %349 : vector<4x32xf32> to vector<4x32xbf16>
    %cst_60 = arith.constant dense<0.000000e+00> : vector<4x256xf32>
    %363 = tpu.matmul %362, %43, %cst_60 {dimension_numbers = #tpu.dot_dimension_numbers<[1], [0], [0], [1], [0, 0, 1, 1], [], []>} : vector<4x32xbf16>, vector<32x256xbf16>, vector<4x256xf32> -> vector<4x256xf32>
    %364 = vector.extract_strided_slice %363 {offsets = [0, 0], sizes = [4, 128], strides = [1, 1]} : vector<4x256xf32> to vector<4x128xf32>
    %365 = vector.extract_strided_slice %363 {offsets = [0, 128], sizes = [4, 128], strides = [1, 1]} : vector<4x256xf32> to vector<4x128xf32>
    %366 = vector.shape_cast %48 : vector<4x1xi1> to vector<4x1xi1>
    %367 = vector.broadcast %366 : vector<4x1xi1> to vector<4x128xi1>
    %368 = arith.select %367, %364, %365 : vector<4x128xi1>, vector<4x128xf32>
    %369 = arith.addf %361, %368 : vector<4x128xf32>
    %370 = arith.negf %369 : vector<4x128xf32>
    %371 = math.exp %370 : vector<4x128xf32>
    %cst_61 = arith.constant 1.000000e+00 : f32
    %372 = vector.broadcast %cst_61 : f32 to vector<4x128xf32>
    %373 = arith.addf %372, %371 : vector<4x128xf32>
    %374 = arith.divf %372, %373 : vector<4x128xf32>
    %375 = math.tanh %369 : vector<4x128xf32>
    %376 = vector.extract_strided_slice %374 {offsets = [0, 0], sizes = [4, 32], strides = [1, 1]} : vector<4x128xf32> to vector<4x32xf32>
    %377 = vector.extract_strided_slice %374 {offsets = [0, 32], sizes = [4, 32], strides = [1, 1]} : vector<4x128xf32> to vector<4x32xf32>
    %378 = vector.extract_strided_slice %375 {offsets = [0, 64], sizes = [4, 32], strides = [1, 1]} : vector<4x128xf32> to vector<4x32xf32>
    %379 = vector.extract_strided_slice %374 {offsets = [0, 96], sizes = [4, 32], strides = [1, 1]} : vector<4x128xf32> to vector<4x32xf32>
    %380 = arith.mulf %377, %356 : vector<4x32xf32>
    %381 = arith.mulf %376, %378 : vector<4x32xf32>
    %382 = arith.addf %380, %381 : vector<4x32xf32>
    %383 = math.tanh %382 : vector<4x32xf32>
    %384 = arith.mulf %379, %383 : vector<4x32xf32>
    %385 = vector.extract_strided_slice %45 {offsets = [7, 0, 0], sizes = [1, 4, 1], strides = [1, 1, 1]} : vector<8x4x1xf32> to vector<1x4x1xf32>
    %386 = vector.shape_cast %385 : vector<1x4x1xf32> to vector<4x1xf32>
    %387 = vector.broadcast %386 : vector<4x1xf32> to vector<4x32xf32>
    %388 = arith.mulf %387, %384 : vector<4x32xf32>
    %389 = vector.extract_strided_slice %388 {offsets = [0, 0], sizes = [2, 32], strides = [1, 1]} : vector<4x32xf32> to vector<2x32xf32>
    %390 = vector.extract_strided_slice %388 {offsets = [2, 0], sizes = [2, 32], strides = [1, 1]} : vector<4x32xf32> to vector<2x32xf32>
    %391 = tpu.concatenate %93, %137, %181, %225, %269, %313, %357, %389 in 0 : vector<2x32xf32>, vector<2x32xf32>, vector<2x32xf32>, vector<2x32xf32>, vector<2x32xf32>, vector<2x32xf32>, vector<2x32xf32>, vector<2x32xf32> -> vector<16x32xf32>
    %392 = tpu.concatenate %390, %358, %314, %270, %226, %182, %138, %94 in 0 : vector<2x32xf32>, vector<2x32xf32>, vector<2x32xf32>, vector<2x32xf32>, vector<2x32xf32>, vector<2x32xf32>, vector<2x32xf32>, vector<2x32xf32> -> vector<16x32xf32>
    %393 = tpu.concatenate %391, %392 in 1 : vector<16x32xf32>, vector<16x32xf32> -> vector<16x64xf32>
    %394 = arith.truncf %393 : vector<16x64xf32> to vector<16x64xbf16>
    %c0_62 = arith.constant 0 : index
    %c0_63 = arith.constant 0 : index
    %395 = vector.load %arg6[%c0_62, %c0_63] : memref<64x5xbf16, #tpu.memory_space<vmem>>, vector<64x5xbf16>
    %cst_64 = arith.constant dense<0.000000e+00> : vector<16x5xf32>
    %396 = tpu.matmul %394, %395, %cst_64 {dimension_numbers = #tpu.dot_dimension_numbers<[1], [0], [0], [1], [0, 0, 1, 1], [], []>} : vector<16x64xbf16>, vector<64x5xbf16>, vector<16x5xf32> -> vector<16x5xf32>
    %397 = vector.broadcast %3 : vector<1x5xf32> to vector<16x5xf32>
    %398 = arith.addf %396, %397 : vector<16x5xf32>
    %399 = vector.shape_cast %398 : vector<16x5xf32> to vector<8x2x5xf32>
    %c0_65 = arith.constant 0 : index
    %c0_66 = arith.constant 0 : index
    %c0_67 = arith.constant 0 : index
    %c0_68 = arith.constant 0 : index
    %400 = vector.load %arg8[%c0_65, %c0_66, %c0_67, %c0_68] : memref<1x8x2x5xf32, #tpu.memory_space<vmem>>, vector<1x8x2x5xf32>
    %401 = vector.shape_cast %400 : vector<1x8x2x5xf32> to vector<8x2x5xf32>
    %402 = vector.shape_cast %399 : vector<8x2x5xf32> to vector<1x8x2x5xf32>
    tpu.vector_store %arg8[%c0_65, %c0_66, %c0_67, %c0_68], %402 {strides = array<i32>} : memref<1x8x2x5xf32, #tpu.memory_space<vmem>>, vector<1x8x2x5xf32>,
    %403 = vector.extract_strided_slice %398 {offsets = [0, 0], sizes = [2, 5], strides = [1, 1]} : vector<16x5xf32> to vector<2x5xf32>
    %404 = vector.broadcast %4 : vector<1x5xf32> to vector<2x5xf32>
    %405 = arith.addf %404, %403 : vector<2x5xf32>
    %c0_i32 = arith.constant 0 : i32
    %406 = vector.broadcast %c0_i32 : i32 to vector<2x5xi32>
    %c0_69 = arith.constant 0 : index
    %c0_70 = arith.constant 0 : index
    %c0_71 = arith.constant 0 : index
    %c0_72 = arith.constant 0 : index
    %407 = vector.load %arg10[%c0_69, %c0_70, %c0_71, %c0_72] : memref<1x8x2x5xi32, #tpu.memory_space<vmem>>, vector<1x1x2x5xi32>
    %408 = vector.shape_cast %407 : vector<1x1x2x5xi32> to vector<2x5xi32>
    %409 = vector.shape_cast %406 : vector<2x5xi32> to vector<1x1x2x5xi32>
    tpu.vector_store %arg10[%c0_69, %c0_70, %c0_71, %c0_72], %409 {strides = array<i32>} : memref<1x8x2x5xi32, #tpu.memory_space<vmem>>, vector<1x1x2x5xi32>,
    %410 = vector.extract_strided_slice %398 {offsets = [2, 0], sizes = [2, 5], strides = [1, 1]} : vector<16x5xf32> to vector<2x5xf32>
    %411 = vector.shape_cast %405 : vector<2x5xf32> to vector<2x5x1xf32>
    %412 = vector.shape_cast %6 : vector<5x5xf32> to vector<1x5x5xf32>
    %413 = vector.broadcast %411 : vector<2x5x1xf32> to vector<2x5x5xf32>
    %414 = vector.broadcast %412 : vector<1x5x5xf32> to vector<2x5x5xf32>
    %415 = arith.addf %413, %414 : vector<2x5x5xf32>
    %416 = vector.shape_cast %410 : vector<2x5xf32> to vector<2x1x5xf32>
    %417 = vector.broadcast %416 : vector<2x1x5xf32> to vector<2x5x5xf32>
    %418 = arith.addf %415, %417 : vector<2x5x5xf32>
    %cst_73 = arith.constant dense<0xFF800000> : vector<2x5xf32>
    %419 = vector.multi_reduction <maximumf>, %418, %cst_73 [1] : vector<2x5x5xf32> to vector<2x5xf32>
    %420 = tpu.iota {dimensions = array<i32: 1>} : vector<2x5x5xi32>
    %421 = vector.shape_cast %419 : vector<2x5xf32> to vector<2x1x5xf32>
    %422 = vector.broadcast %421 : vector<2x1x5xf32> to vector<2x5x5xf32>
    %423 = arith.cmpf oeq, %418, %422 : vector<2x5x5xf32>
    %c5_i32 = arith.constant 5 : i32
    %424 = vector.broadcast %c5_i32 : i32 to vector<2x5x5xi32>
    %425 = arith.select %423, %420, %424 : vector<2x5x5xi1>, vector<2x5x5xi32>
    %cst_74 = arith.constant dense<2147483647> : vector<2x5xi32>
    %426 = vector.multi_reduction <minsi>, %425, %cst_74 [1] : vector<2x5x5xi32> to vector<2x5xi32>
    %c0_75 = arith.constant 0 : index
    %c1_76 = arith.constant 1 : index
    %c0_77 = arith.constant 0 : index
    %c0_78 = arith.constant 0 : index
    %427 = vector.load %arg10[%c0_75, %c1_76, %c0_77, %c0_78] : memref<1x8x2x5xi32, #tpu.memory_space<vmem>>, vector<1x1x2x5xi32>
    %428 = vector.shape_cast %427 : vector<1x1x2x5xi32> to vector<2x5xi32>
    %429 = vector.shape_cast %426 : vector<2x5xi32> to vector<1x1x2x5xi32>
    tpu.vector_store %arg10[%c0_75, %c1_76, %c0_77, %c0_78], %429 {strides = array<i32>} : memref<1x8x2x5xi32, #tpu.memory_space<vmem>>, vector<1x1x2x5xi32>,
    %430 = vector.extract_strided_slice %45 {offsets = [1, 0, 0], sizes = [1, 2, 1], strides = [1, 1, 1]} : vector<8x4x1xf32> to vector<1x2x1xf32>
    %431 = vector.shape_cast %430 : vector<1x2x1xf32> to vector<2x1xf32>
    %432 = vector.broadcast %431 : vector<2x1xf32> to vector<2x5xf32>
    %433 = arith.mulf %432, %419 : vector<2x5xf32>
    %cst_79 = arith.constant 1.000000e+00 : f32
    %434 = vector.broadcast %cst_79 : f32 to vector<2x1xf32>
    %435 = arith.subf %434, %431 : vector<2x1xf32>
    %436 = vector.broadcast %435 : vector<2x1xf32> to vector<2x5xf32>
    %437 = arith.mulf %436, %405 : vector<2x5xf32>
    %438 = arith.addf %433, %437 : vector<2x5xf32>
    %439 = vector.extract_strided_slice %398 {offsets = [4, 0], sizes = [2, 5], strides = [1, 1]} : vector<16x5xf32> to vector<2x5xf32>
    %440 = vector.shape_cast %438 : vector<2x5xf32> to vector<2x5x1xf32>
    %441 = vector.shape_cast %6 : vector<5x5xf32> to vector<1x5x5xf32>
    %442 = vector.broadcast %440 : vector<2x5x1xf32> to vector<2x5x5xf32>
    %443 = vector.broadcast %441 : vector<1x5x5xf32> to vector<2x5x5xf32>
    %444 = arith.addf %442, %443 : vector<2x5x5xf32>
    %445 = vector.shape_cast %439 : vector<2x5xf32> to vector<2x1x5xf32>
    %446 = vector.broadcast %445 : vector<2x1x5xf32> to vector<2x5x5xf32>
    %447 = arith.addf %444, %446 : vector<2x5x5xf32>
    %cst_80 = arith.constant dense<0xFF800000> : vector<2x5xf32>
    %448 = vector.multi_reduction <maximumf>, %447, %cst_80 [1] : vector<2x5x5xf32> to vector<2x5xf32>
    %449 = tpu.iota {dimensions = array<i32: 1>} : vector<2x5x5xi32>
    %450 = vector.shape_cast %448 : vector<2x5xf32> to vector<2x1x5xf32>
    %451 = vector.broadcast %450 : vector<2x1x5xf32> to vector<2x5x5xf32>
    %452 = arith.cmpf oeq, %447, %451 : vector<2x5x5xf32>
    %c5_i32_81 = arith.constant 5 : i32
    %453 = vector.broadcast %c5_i32_81 : i32 to vector<2x5x5xi32>
    %454 = arith.select %452, %449, %453 : vector<2x5x5xi1>, vector<2x5x5xi32>
    %cst_82 = arith.constant dense<2147483647> : vector<2x5xi32>
    %455 = vector.multi_reduction <minsi>, %454, %cst_82 [1] : vector<2x5x5xi32> to vector<2x5xi32>
    %c0_83 = arith.constant 0 : index
    %c2_84 = arith.constant 2 : index
    %c0_85 = arith.constant 0 : index
    %c0_86 = arith.constant 0 : index
    %456 = vector.load %arg10[%c0_83, %c2_84, %c0_85, %c0_86] : memref<1x8x2x5xi32, #tpu.memory_space<vmem>>, vector<1x1x2x5xi32>
    %457 = vector.shape_cast %456 : vector<1x1x2x5xi32> to vector<2x5xi32>
    %458 = vector.shape_cast %455 : vector<2x5xi32> to vector<1x1x2x5xi32>
    tpu.vector_store %arg10[%c0_83, %c2_84, %c0_85, %c0_86], %458 {strides = array<i32>} : memref<1x8x2x5xi32, #tpu.memory_space<vmem>>, vector<1x1x2x5xi32>,
    %459 = vector.extract_strided_slice %45 {offsets = [2, 0, 0], sizes = [1, 2, 1], strides = [1, 1, 1]} : vector<8x4x1xf32> to vector<1x2x1xf32>
    %460 = vector.shape_cast %459 : vector<1x2x1xf32> to vector<2x1xf32>
    %461 = vector.broadcast %460 : vector<2x1xf32> to vector<2x5xf32>
    %462 = arith.mulf %461, %448 : vector<2x5xf32>
    %cst_87 = arith.constant 1.000000e+00 : f32
    %463 = vector.broadcast %cst_87 : f32 to vector<2x1xf32>
    %464 = arith.subf %463, %460 : vector<2x1xf32>
    %465 = vector.broadcast %464 : vector<2x1xf32> to vector<2x5xf32>
    %466 = arith.mulf %465, %438 : vector<2x5xf32>
    %467 = arith.addf %462, %466 : vector<2x5xf32>
    %468 = vector.extract_strided_slice %398 {offsets = [6, 0], sizes = [2, 5], strides = [1, 1]} : vector<16x5xf32> to vector<2x5xf32>
    %469 = vector.shape_cast %467 : vector<2x5xf32> to vector<2x5x1xf32>
    %470 = vector.shape_cast %6 : vector<5x5xf32> to vector<1x5x5xf32>
    %471 = vector.broadcast %469 : vector<2x5x1xf32> to vector<2x5x5xf32>
    %472 = vector.broadcast %470 : vector<1x5x5xf32> to vector<2x5x5xf32>
    %473 = arith.addf %471, %472 : vector<2x5x5xf32>
    %474 = vector.shape_cast %468 : vector<2x5xf32> to vector<2x1x5xf32>
    %475 = vector.broadcast %474 : vector<2x1x5xf32> to vector<2x5x5xf32>
    %476 = arith.addf %473, %475 : vector<2x5x5xf32>
    %cst_88 = arith.constant dense<0xFF800000> : vector<2x5xf32>
    %477 = vector.multi_reduction <maximumf>, %476, %cst_88 [1] : vector<2x5x5xf32> to vector<2x5xf32>
    %478 = tpu.iota {dimensions = array<i32: 1>} : vector<2x5x5xi32>
    %479 = vector.shape_cast %477 : vector<2x5xf32> to vector<2x1x5xf32>
    %480 = vector.broadcast %479 : vector<2x1x5xf32> to vector<2x5x5xf32>
    %481 = arith.cmpf oeq, %476, %480 : vector<2x5x5xf32>
    %c5_i32_89 = arith.constant 5 : i32
    %482 = vector.broadcast %c5_i32_89 : i32 to vector<2x5x5xi32>
    %483 = arith.select %481, %478, %482 : vector<2x5x5xi1>, vector<2x5x5xi32>
    %cst_90 = arith.constant dense<2147483647> : vector<2x5xi32>
    %484 = vector.multi_reduction <minsi>, %483, %cst_90 [1] : vector<2x5x5xi32> to vector<2x5xi32>
    %c0_91 = arith.constant 0 : index
    %c3_92 = arith.constant 3 : index
    %c0_93 = arith.constant 0 : index
    %c0_94 = arith.constant 0 : index
    %485 = vector.load %arg10[%c0_91, %c3_92, %c0_93, %c0_94] : memref<1x8x2x5xi32, #tpu.memory_space<vmem>>, vector<1x1x2x5xi32>
    %486 = vector.shape_cast %485 : vector<1x1x2x5xi32> to vector<2x5xi32>
    %487 = vector.shape_cast %484 : vector<2x5xi32> to vector<1x1x2x5xi32>
    tpu.vector_store %arg10[%c0_91, %c3_92, %c0_93, %c0_94], %487 {strides = array<i32>} : memref<1x8x2x5xi32, #tpu.memory_space<vmem>>, vector<1x1x2x5xi32>,
    %488 = vector.extract_strided_slice %45 {offsets = [3, 0, 0], sizes = [1, 2, 1], strides = [1, 1, 1]} : vector<8x4x1xf32> to vector<1x2x1xf32>
    %489 = vector.shape_cast %488 : vector<1x2x1xf32> to vector<2x1xf32>
    %490 = vector.broadcast %489 : vector<2x1xf32> to vector<2x5xf32>
    %491 = arith.mulf %490, %477 : vector<2x5xf32>
    %cst_95 = arith.constant 1.000000e+00 : f32
    %492 = vector.broadcast %cst_95 : f32 to vector<2x1xf32>
    %493 = arith.subf %492, %489 : vector<2x1xf32>
    %494 = vector.broadcast %493 : vector<2x1xf32> to vector<2x5xf32>
    %495 = arith.mulf %494, %467 : vector<2x5xf32>
    %496 = arith.addf %491, %495 : vector<2x5xf32>
    %497 = vector.extract_strided_slice %398 {offsets = [8, 0], sizes = [2, 5], strides = [1, 1]} : vector<16x5xf32> to vector<2x5xf32>
    %498 = vector.shape_cast %496 : vector<2x5xf32> to vector<2x5x1xf32>
    %499 = vector.shape_cast %6 : vector<5x5xf32> to vector<1x5x5xf32>
    %500 = vector.broadcast %498 : vector<2x5x1xf32> to vector<2x5x5xf32>
    %501 = vector.broadcast %499 : vector<1x5x5xf32> to vector<2x5x5xf32>
    %502 = arith.addf %500, %501 : vector<2x5x5xf32>
    %503 = vector.shape_cast %497 : vector<2x5xf32> to vector<2x1x5xf32>
    %504 = vector.broadcast %503 : vector<2x1x5xf32> to vector<2x5x5xf32>
    %505 = arith.addf %502, %504 : vector<2x5x5xf32>
    %cst_96 = arith.constant dense<0xFF800000> : vector<2x5xf32>
    %506 = vector.multi_reduction <maximumf>, %505, %cst_96 [1] : vector<2x5x5xf32> to vector<2x5xf32>
    %507 = tpu.iota {dimensions = array<i32: 1>} : vector<2x5x5xi32>
    %508 = vector.shape_cast %506 : vector<2x5xf32> to vector<2x1x5xf32>
    %509 = vector.broadcast %508 : vector<2x1x5xf32> to vector<2x5x5xf32>
    %510 = arith.cmpf oeq, %505, %509 : vector<2x5x5xf32>
    %c5_i32_97 = arith.constant 5 : i32
    %511 = vector.broadcast %c5_i32_97 : i32 to vector<2x5x5xi32>
    %512 = arith.select %510, %507, %511 : vector<2x5x5xi1>, vector<2x5x5xi32>
    %cst_98 = arith.constant dense<2147483647> : vector<2x5xi32>
    %513 = vector.multi_reduction <minsi>, %512, %cst_98 [1] : vector<2x5x5xi32> to vector<2x5xi32>
    %c0_99 = arith.constant 0 : index
    %c4_100 = arith.constant 4 : index
    %c0_101 = arith.constant 0 : index
    %c0_102 = arith.constant 0 : index
    %514 = vector.load %arg10[%c0_99, %c4_100, %c0_101, %c0_102] : memref<1x8x2x5xi32, #tpu.memory_space<vmem>>, vector<1x1x2x5xi32>
    %515 = vector.shape_cast %514 : vector<1x1x2x5xi32> to vector<2x5xi32>
    %516 = vector.shape_cast %513 : vector<2x5xi32> to vector<1x1x2x5xi32>
    tpu.vector_store %arg10[%c0_99, %c4_100, %c0_101, %c0_102], %516 {strides = array<i32>} : memref<1x8x2x5xi32, #tpu.memory_space<vmem>>, vector<1x1x2x5xi32>,
    %517 = vector.extract_strided_slice %45 {offsets = [4, 0, 0], sizes = [1, 2, 1], strides = [1, 1, 1]} : vector<8x4x1xf32> to vector<1x2x1xf32>
    %518 = vector.shape_cast %517 : vector<1x2x1xf32> to vector<2x1xf32>
    %519 = vector.broadcast %518 : vector<2x1xf32> to vector<2x5xf32>
    %520 = arith.mulf %519, %506 : vector<2x5xf32>
    %cst_103 = arith.constant 1.000000e+00 : f32
    %521 = vector.broadcast %cst_103 : f32 to vector<2x1xf32>
    %522 = arith.subf %521, %518 : vector<2x1xf32>
    %523 = vector.broadcast %522 : vector<2x1xf32> to vector<2x5xf32>
    %524 = arith.mulf %523, %496 : vector<2x5xf32>
    %525 = arith.addf %520, %524 : vector<2x5xf32>
    %526 = vector.extract_strided_slice %398 {offsets = [10, 0], sizes = [2, 5], strides = [1, 1]} : vector<16x5xf32> to vector<2x5xf32>
    %527 = vector.shape_cast %525 : vector<2x5xf32> to vector<2x5x1xf32>
    %528 = vector.shape_cast %6 : vector<5x5xf32> to vector<1x5x5xf32>
    %529 = vector.broadcast %527 : vector<2x5x1xf32> to vector<2x5x5xf32>
    %530 = vector.broadcast %528 : vector<1x5x5xf32> to vector<2x5x5xf32>
    %531 = arith.addf %529, %530 : vector<2x5x5xf32>
    %532 = vector.shape_cast %526 : vector<2x5xf32> to vector<2x1x5xf32>
    %533 = vector.broadcast %532 : vector<2x1x5xf32> to vector<2x5x5xf32>
    %534 = arith.addf %531, %533 : vector<2x5x5xf32>
    %cst_104 = arith.constant dense<0xFF800000> : vector<2x5xf32>
    %535 = vector.multi_reduction <maximumf>, %534, %cst_104 [1] : vector<2x5x5xf32> to vector<2x5xf32>
    %536 = tpu.iota {dimensions = array<i32: 1>} : vector<2x5x5xi32>
    %537 = vector.shape_cast %535 : vector<2x5xf32> to vector<2x1x5xf32>
    %538 = vector.broadcast %537 : vector<2x1x5xf32> to vector<2x5x5xf32>
    %539 = arith.cmpf oeq, %534, %538 : vector<2x5x5xf32>
    %c5_i32_105 = arith.constant 5 : i32
    %540 = vector.broadcast %c5_i32_105 : i32 to vector<2x5x5xi32>
    %541 = arith.select %539, %536, %540 : vector<2x5x5xi1>, vector<2x5x5xi32>
    %cst_106 = arith.constant dense<2147483647> : vector<2x5xi32>
    %542 = vector.multi_reduction <minsi>, %541, %cst_106 [1] : vector<2x5x5xi32> to vector<2x5xi32>
    %c0_107 = arith.constant 0 : index
    %c5_108 = arith.constant 5 : index
    %c0_109 = arith.constant 0 : index
    %c0_110 = arith.constant 0 : index
    %543 = vector.load %arg10[%c0_107, %c5_108, %c0_109, %c0_110] : memref<1x8x2x5xi32, #tpu.memory_space<vmem>>, vector<1x1x2x5xi32>
    %544 = vector.shape_cast %543 : vector<1x1x2x5xi32> to vector<2x5xi32>
    %545 = vector.shape_cast %542 : vector<2x5xi32> to vector<1x1x2x5xi32>
    tpu.vector_store %arg10[%c0_107, %c5_108, %c0_109, %c0_110], %545 {strides = array<i32>} : memref<1x8x2x5xi32, #tpu.memory_space<vmem>>, vector<1x1x2x5xi32>,
    %546 = vector.extract_strided_slice %45 {offsets = [5, 0, 0], sizes = [1, 2, 1], strides = [1, 1, 1]} : vector<8x4x1xf32> to vector<1x2x1xf32>
    %547 = vector.shape_cast %546 : vector<1x2x1xf32> to vector<2x1xf32>
    %548 = vector.broadcast %547 : vector<2x1xf32> to vector<2x5xf32>
    %549 = arith.mulf %548, %535 : vector<2x5xf32>
    %cst_111 = arith.constant 1.000000e+00 : f32
    %550 = vector.broadcast %cst_111 : f32 to vector<2x1xf32>
    %551 = arith.subf %550, %547 : vector<2x1xf32>
    %552 = vector.broadcast %551 : vector<2x1xf32> to vector<2x5xf32>
    %553 = arith.mulf %552, %525 : vector<2x5xf32>
    %554 = arith.addf %549, %553 : vector<2x5xf32>
    %555 = vector.extract_strided_slice %398 {offsets = [12, 0], sizes = [2, 5], strides = [1, 1]} : vector<16x5xf32> to vector<2x5xf32>
    %556 = vector.shape_cast %554 : vector<2x5xf32> to vector<2x5x1xf32>
    %557 = vector.shape_cast %6 : vector<5x5xf32> to vector<1x5x5xf32>
    %558 = vector.broadcast %556 : vector<2x5x1xf32> to vector<2x5x5xf32>
    %559 = vector.broadcast %557 : vector<1x5x5xf32> to vector<2x5x5xf32>
    %560 = arith.addf %558, %559 : vector<2x5x5xf32>
    %561 = vector.shape_cast %555 : vector<2x5xf32> to vector<2x1x5xf32>
    %562 = vector.broadcast %561 : vector<2x1x5xf32> to vector<2x5x5xf32>
    %563 = arith.addf %560, %562 : vector<2x5x5xf32>
    %cst_112 = arith.constant dense<0xFF800000> : vector<2x5xf32>
    %564 = vector.multi_reduction <maximumf>, %563, %cst_112 [1] : vector<2x5x5xf32> to vector<2x5xf32>
    %565 = tpu.iota {dimensions = array<i32: 1>} : vector<2x5x5xi32>
    %566 = vector.shape_cast %564 : vector<2x5xf32> to vector<2x1x5xf32>
    %567 = vector.broadcast %566 : vector<2x1x5xf32> to vector<2x5x5xf32>
    %568 = arith.cmpf oeq, %563, %567 : vector<2x5x5xf32>
    %c5_i32_113 = arith.constant 5 : i32
    %569 = vector.broadcast %c5_i32_113 : i32 to vector<2x5x5xi32>
    %570 = arith.select %568, %565, %569 : vector<2x5x5xi1>, vector<2x5x5xi32>
    %cst_114 = arith.constant dense<2147483647> : vector<2x5xi32>
    %571 = vector.multi_reduction <minsi>, %570, %cst_114 [1] : vector<2x5x5xi32> to vector<2x5xi32>
    %c0_115 = arith.constant 0 : index
    %c6 = arith.constant 6 : index
    %c0_116 = arith.constant 0 : index
    %c0_117 = arith.constant 0 : index
    %572 = vector.load %arg10[%c0_115, %c6, %c0_116, %c0_117] : memref<1x8x2x5xi32, #tpu.memory_space<vmem>>, vector<1x1x2x5xi32>
    %573 = vector.shape_cast %572 : vector<1x1x2x5xi32> to vector<2x5xi32>
    %574 = vector.shape_cast %571 : vector<2x5xi32> to vector<1x1x2x5xi32>
    tpu.vector_store %arg10[%c0_115, %c6, %c0_116, %c0_117], %574 {strides = array<i32>} : memref<1x8x2x5xi32, #tpu.memory_space<vmem>>, vector<1x1x2x5xi32>,
    %575 = vector.extract_strided_slice %45 {offsets = [6, 0, 0], sizes = [1, 2, 1], strides = [1, 1, 1]} : vector<8x4x1xf32> to vector<1x2x1xf32>
    %576 = vector.shape_cast %575 : vector<1x2x1xf32> to vector<2x1xf32>
    %577 = vector.broadcast %576 : vector<2x1xf32> to vector<2x5xf32>
    %578 = arith.mulf %577, %564 : vector<2x5xf32>
    %cst_118 = arith.constant 1.000000e+00 : f32
    %579 = vector.broadcast %cst_118 : f32 to vector<2x1xf32>
    %580 = arith.subf %579, %576 : vector<2x1xf32>
    %581 = vector.broadcast %580 : vector<2x1xf32> to vector<2x5xf32>
    %582 = arith.mulf %581, %554 : vector<2x5xf32>
    %583 = arith.addf %578, %582 : vector<2x5xf32>
    %584 = vector.extract_strided_slice %398 {offsets = [14, 0], sizes = [2, 5], strides = [1, 1]} : vector<16x5xf32> to vector<2x5xf32>
    %585 = vector.shape_cast %583 : vector<2x5xf32> to vector<2x5x1xf32>
    %586 = vector.shape_cast %6 : vector<5x5xf32> to vector<1x5x5xf32>
    %587 = vector.broadcast %585 : vector<2x5x1xf32> to vector<2x5x5xf32>
    %588 = vector.broadcast %586 : vector<1x5x5xf32> to vector<2x5x5xf32>
    %589 = arith.addf %587, %588 : vector<2x5x5xf32>
    %590 = vector.shape_cast %584 : vector<2x5xf32> to vector<2x1x5xf32>
    %591 = vector.broadcast %590 : vector<2x1x5xf32> to vector<2x5x5xf32>
    %592 = arith.addf %589, %591 : vector<2x5x5xf32>
    %cst_119 = arith.constant dense<0xFF800000> : vector<2x5xf32>
    %593 = vector.multi_reduction <maximumf>, %592, %cst_119 [1] : vector<2x5x5xf32> to vector<2x5xf32>
    %594 = tpu.iota {dimensions = array<i32: 1>} : vector<2x5x5xi32>
    %595 = vector.shape_cast %593 : vector<2x5xf32> to vector<2x1x5xf32>
    %596 = vector.broadcast %595 : vector<2x1x5xf32> to vector<2x5x5xf32>
    %597 = arith.cmpf oeq, %592, %596 : vector<2x5x5xf32>
    %c5_i32_120 = arith.constant 5 : i32
    %598 = vector.broadcast %c5_i32_120 : i32 to vector<2x5x5xi32>
    %599 = arith.select %597, %594, %598 : vector<2x5x5xi1>, vector<2x5x5xi32>
    %cst_121 = arith.constant dense<2147483647> : vector<2x5xi32>
    %600 = vector.multi_reduction <minsi>, %599, %cst_121 [1] : vector<2x5x5xi32> to vector<2x5xi32>
    %c0_122 = arith.constant 0 : index
    %c7 = arith.constant 7 : index
    %c0_123 = arith.constant 0 : index
    %c0_124 = arith.constant 0 : index
    %601 = vector.load %arg10[%c0_122, %c7, %c0_123, %c0_124] : memref<1x8x2x5xi32, #tpu.memory_space<vmem>>, vector<1x1x2x5xi32>
    %602 = vector.shape_cast %601 : vector<1x1x2x5xi32> to vector<2x5xi32>
    %603 = vector.shape_cast %600 : vector<2x5xi32> to vector<1x1x2x5xi32>
    tpu.vector_store %arg10[%c0_122, %c7, %c0_123, %c0_124], %603 {strides = array<i32>} : memref<1x8x2x5xi32, #tpu.memory_space<vmem>>, vector<1x1x2x5xi32>,
    %604 = vector.extract_strided_slice %45 {offsets = [7, 0, 0], sizes = [1, 2, 1], strides = [1, 1, 1]} : vector<8x4x1xf32> to vector<1x2x1xf32>
    %605 = vector.shape_cast %604 : vector<1x2x1xf32> to vector<2x1xf32>
    %606 = vector.broadcast %605 : vector<2x1xf32> to vector<2x5xf32>
    %607 = arith.mulf %606, %593 : vector<2x5xf32>
    %cst_125 = arith.constant 1.000000e+00 : f32
    %608 = vector.broadcast %cst_125 : f32 to vector<2x1xf32>
    %609 = arith.subf %608, %605 : vector<2x1xf32>
    %610 = vector.broadcast %609 : vector<2x1xf32> to vector<2x5xf32>
    %611 = arith.mulf %610, %583 : vector<2x5xf32>
    %612 = arith.addf %607, %611 : vector<2x5xf32>
    %613 = vector.broadcast %5 : vector<1x5xf32> to vector<2x5xf32>
    %614 = arith.addf %612, %613 : vector<2x5xf32>
    %c0_126 = arith.constant 0 : index
    %c0_127 = arith.constant 0 : index
    %c0_128 = arith.constant 0 : index
    %615 = vector.load %arg9[%c0_126, %c0_127, %c0_128] : memref<1x2x5xf32, #tpu.memory_space<vmem>>, vector<1x2x5xf32>
    %616 = vector.shape_cast %615 : vector<1x2x5xf32> to vector<2x5xf32>
    %617 = vector.shape_cast %614 : vector<2x5xf32> to vector<1x2x5xf32>
    tpu.vector_store %arg9[%c0_126, %c0_127, %c0_128], %617 {strides = array<i32>} : memref<1x2x5xf32, #tpu.memory_space<vmem>>, vector<1x2x5xf32>,
    return
  }
  func.func @transform_0(%arg0: i32) -> (i32, i32, i32, i32) {
    %c0_i32 = arith.constant 0 : i32
    %c0_i32_0 = arith.constant 0 : i32
    %c0_i32_1 = arith.constant 0 : i32
    %c0_i32_2 = arith.constant 0 : i32
    return %arg0, %c0_i32, %c0_i32_0, %c0_i32_1 : i32, i32, i32, i32
  }
  func.func @transform_1(%arg0: i32) -> (i32, i32, i32, i32) {
    %c0_i32 = arith.constant 0 : i32
    %c0_i32_0 = arith.constant 0 : i32
    %c0_i32_1 = arith.constant 0 : i32
    %c0_i32_2 = arith.constant 0 : i32
    return %arg0, %c0_i32, %c0_i32_0, %c0_i32_1 : i32, i32, i32, i32
  }
  func.func @transform_2(%arg0: i32) -> (i32, i32, i32, i32) {
    %c0_i32 = arith.constant 0 : i32
    %c0_i32_0 = arith.constant 0 : i32
    %c0_i32_1 = arith.constant 0 : i32
    %c0_i32_2 = arith.constant 0 : i32
    return %arg0, %c0_i32, %c0_i32_0, %c0_i32_1 : i32, i32, i32, i32
  }
  func.func @transform_3(%arg0: i32) -> (i32, i32) {
    %c0_i32 = arith.constant 0 : i32
    %c0_i32_0 = arith.constant 0 : i32
    %c0_i32_1 = arith.constant 0 : i32
    return %c0_i32, %c0_i32_0 : i32, i32
  }
  func.func @transform_4(%arg0: i32) -> (i32, i32) {
    %c0_i32 = arith.constant 0 : i32
    %c0_i32_0 = arith.constant 0 : i32
    %c0_i32_1 = arith.constant 0 : i32
    return %c0_i32, %c0_i32_0 : i32, i32
  }
  func.func @transform_5(%arg0: i32) -> (i32, i32) {
    %c0_i32 = arith.constant 0 : i32
    %c0_i32_0 = arith.constant 0 : i32
    %c0_i32_1 = arith.constant 0 : i32
    return %c0_i32, %c0_i32_0 : i32, i32
  }
  func.func @transform_6(%arg0: i32) -> (i32, i32) {
    %c0_i32 = arith.constant 0 : i32
    %c0_i32_0 = arith.constant 0 : i32
    %c0_i32_1 = arith.constant 0 : i32
    return %c0_i32, %c0_i32_0 : i32, i32
  }
  func.func @transform_7(%arg0: i32) -> (i32, i32, i32, i32) {
    %c0_i32 = arith.constant 0 : i32
    %c0_i32_0 = arith.constant 0 : i32
    %c0_i32_1 = arith.constant 0 : i32
    %c0_i32_2 = arith.constant 0 : i32
    return %arg0, %c0_i32, %c0_i32_0, %c0_i32_1 : i32, i32, i32, i32
  }
  func.func @transform_8(%arg0: i32) -> (i32, i32, i32) {
    %c0_i32 = arith.constant 0 : i32
    %c0_i32_0 = arith.constant 0 : i32
    %c0_i32_1 = arith.constant 0 : i32
    return %arg0, %c0_i32, %c0_i32_0 : i32, i32, i32
  }
  func.func @transform_9(%arg0: i32) -> (i32, i32, i32, i32) {
    %c0_i32 = arith.constant 0 : i32
    %c0_i32_0 = arith.constant 0 : i32
    %c0_i32_1 = arith.constant 0 : i32
    %c0_i32_2 = arith.constant 0 : i32
    return %arg0, %c0_i32, %c0_i32_0, %c0_i32_1 : i32, i32, i32, i32
  }
}

</mosaic_0001>

<llo_original>
// kernel: custom-call.6
$region0: #{custom-call.6}
  %s0 = inlined_call_operand.vmem [shape: s32[8,2], index: 0, kind: output, shape index: {}]

// kernel: custom-call.2
$region0: #{custom-call.2}
  %s0 = inlined_call_operand.vmem [shape: s32[2], index: 0, kind: output, shape index: {}]

// kernel: row_classifier_forward.1
$region0: #{row_classifier_forward.1}
  #allocation0 [shape = 'u32[]', space=smem, size = 0x4, offset = 0x4, fixed_abs, tag = 'smem constant byte address 0x4 - core index']
  #allocation1 [shape = 'u32[72,128]{1,0:T(1,128)}', space=vmem, size = 0x9000, scoped, tag = 'internal scratch']
  %s0 = inlined_call_operand.vmem [shape: bf16[1,8,2,32], index: 0, kind: input, shape index: {}]
  %s1 = inlined_call_operand.vmem [shape: f32[1,8,2,15], index: 1, kind: input, shape index: {}]
  %s2 = inlined_call_operand.vmem [shape: f32[1,8,4,1], index: 2, kind: input, shape index: {}]
  %s3 = inlined_call_operand.vmem [shape: bf16[47,256], index: 3, kind: input, shape index: {}]
  %s4 = inlined_call_operand.vmem [shape: bf16[32,256], index: 4, kind: input, shape index: {}]
  %s5 = inlined_call_operand.vmem [shape: bf16[64,5], index: 5, kind: input, shape index: {}]
  %s6 = inlined_call_operand.vmem [shape: f32[16,256], index: 6, kind: input, shape index: {}]
  %s7 = inlined_call_operand.vmem [shape: f32[1,8,2,5], index: 7, kind: output, shape index: {0}]
  %s8 = inlined_call_operand.vmem [shape: f32[1,2,5], index: 8, kind: output, shape index: {1}]
  %s9 = inlined_call_operand.vmem [shape: s32[1,8,2,5], index: 9, kind: output, shape index: {2}]
  %10 = xla_tuple %s7, %s8, %s9
  %s11 = sld [smem:[#allocation0]]
  $region54: #{row_classifier_forward.1} parent=0
    _
  %s13 = ssub.s32 1, %s11
  %s14 = scalar_select 0, %s13, %s11
  // Predicated region
  $region2: #{row_classifier_forward.1} parent=0 // pred_check
    _
  $region3: #{row_classifier_forward.1} parent=0 // pred_check_branch
    %16 = sbr.rel (0) target = $region5
  $region4: #{row_classifier_forward.1} parent=0 // pred_region
    _
  $region5: #{row_classifier_forward.1} parent=0 // pred_fallthru
    _
  // Predicated region
  $region6: #{row_classifier_forward.1} parent=0 // pred_check
    _
  $region7: #{row_classifier_forward.1} parent=0 // pred_check_branch
    %18 = sbr.rel (0) target = $region9
  $region8: #{row_classifier_forward.1} parent=0 // pred_region
    _
  $region9: #{row_classifier_forward.1} parent=0 // pred_fallthru
    _
  // Predicated region
  $region10: #{row_classifier_forward.1} parent=0 // pred_check
    _
  $region11: #{row_classifier_forward.1} parent=0 // pred_check_branch
    %20 = sbr.rel (0) target = $region13
  $region12: #{row_classifier_forward.1} parent=0 // pred_region
    _
  $region13: #{row_classifier_forward.1} parent=0 // pred_fallthru
    _
  // Predicated region
  $region14: #{row_classifier_forward.1} parent=0 // pred_check
    _
  $region15: #{row_classifier_forward.1} parent=0 // pred_check_branch
    %22 = sbr.rel (0) target = $region17
  $region16: #{row_classifier_forward.1} parent=0 // pred_region
    _
  $region17: #{row_classifier_forward.1} parent=0 // pred_fallthru
    _
  // Predicated region
  $region18: #{row_classifier_forward.1} parent=0 // pred_check
    _
  $region19: #{row_classifier_forward.1} parent=0 // pred_check_branch
    %24 = sbr.rel (0) target = $region21
  $region20: #{row_classifier_forward.1} parent=0 // pred_region
    _
  $region21: #{row_classifier_forward.1} parent=0 // pred_fallthru
    _
  // Predicated region
  $region22: #{row_classifier_forward.1} parent=0 // pred_check
    _
  $region23: #{row_classifier_forward.1} parent=0 // pred_check_branch
    %26 = sbr.rel (0) target = $region25
  $region24: #{row_classifier_forward.1} parent=0 // pred_region
    _
  $region25: #{row_classifier_forward.1} parent=0 // pred_fallthru
    _
  // Predicated region
  $region26: #{row_classifier_forward.1} parent=0 // pred_check
    _
  $region27: #{row_classifier_forward.1} parent=0 // pred_check_branch
    %28 = sbr.rel (0) target = $region29
  $region28: #{row_classifier_forward.1} parent=0 // pred_region
    _
  $region29: #{row_classifier_forward.1} parent=0 // pred_fallthru
    _
  %v30 = vld [vmem:[%s6] ss:$8 sm:$0x3]
  %v31 = vld [vmem:[%s6 + $0x1] ss:$0 sm:$0xff]
  %v32 = vld [vmem:[%s6 + $0x2] ss:$0 sm:$0xff]
  %v33 = vld [vmem:[%s6 + $0x3] ss:$0 sm:$0xff]
  %v34 = vld [vmem:[%s6 + $0x4] ss:$0 sm:$0xff]
  %v35 = vld [vmem:[%s6 + $0x5] ss:$0 sm:$0xff]
  %v36 = vld [vmem:[%s6 + $0x10] sm:$0x1f]
  %v37 = vld [vmem:[%s1] sm:$0x3]
  %v38 = vld [vmem:[%s1 + $0x2] sm:$0x3]
  %v39 = vld [vmem:[%s1 + $0x4] sm:$0x3]
  %v40 = vld [vmem:[%s1 + $0x6] sm:$0x3]
  %v41 = vld [vmem:[%s1 + $0x8] sm:$0x3]
  %v42 = vld [vmem:[%s1 + $0xa] sm:$0x3]
  %v43 = vld [vmem:[%s1 + $0xc] sm:$0x3]
  %v44 = vld [vmem:[%s1 + $0xe] sm:$0x3]
  %53 = vst [vmem:[#allocation1] ss:$4 sm:$0xff] %v37
  %s54 = scalar_lea.vmem [#allocation1], 1
  %55 = vst [vmem:[%s54] ss:$4 sm:$0xff] %v38
  %s56 = scalar_lea.vmem [#allocation1], 2
  %57 = vst [vmem:[%s56] ss:$4 sm:$0xff] %v39
  %s58 = scalar_lea.vmem [#allocation1], 3
  %59 = vst [vmem:[%s58] ss:$4 sm:$0xff] %v40
  %s60 = scalar_lea.vmem [#allocation1], 32
  %61 = vst [vmem:[%s60] ss:$4 sm:$0xff] %v41
  %s62 = scalar_lea.vmem [#allocation1], 33
  %63 = vst [vmem:[%s62] ss:$4 sm:$0xff] %v42
  %s64 = scalar_lea.vmem [#allocation1], 34
  %65 = vst [vmem:[%s64] ss:$4 sm:$0xff] %v43
  %s66 = scalar_lea.vmem [#allocation1], 35
  %67 = vst [vmem:[%s66] ss:$4 sm:$0xff] %v44
  %v68 = vld.sshfl [vmem:[#allocation1] sm:$0xff pattern:$0x73625140]
  %v69 = vld.sshfl [vmem:[#allocation1 + $0x20] sm:$0xff pattern:$0x73625140]
  %vm72 = vcmask 121856
  %v73 = vsel %vm72, %v68, 0.0
  %74 = vadd.xlane.f32.xlu0 %v73
  %v75 = vpop.xlane.xlu0 %74
  %v76 = vsel %vm72, %v69, 0.0
  %77 = vadd.xlane.f32.xlu0 %v76
  %v78 = vpop.xlane.xlu0 %77
  %v79 = vrcp.pop 15.0
  %v80 = vmul.f32 15.0, %v79
  %v81 = vsub.f32 1.0, %v80
  %v82 = vmul.f32 %v79, %v81
  %v83 = vadd.f32 %v79, %v82
  %vm84 = vweird.f32 %v79
  %v85 = vsel %vm84, %v79, %v83
  %v86 = vmul.f32 %v75, %v85
  %v87 = vmul.f32 %v78, %v85
  %v91 = vunpack.c.l.s4 269488144
  %v92 = vunpack.c.0.s8 %v91
  %v93 = vperm.slane %v86, %v92
  %v95 = vunpack.c.l.s4 842150450
  %v96 = vunpack.c.0.s8 %v95
  %v97 = vperm.slane %v86, %v96
  %v99 = vunpack.c.l.s4 1414812756
  %v100 = vunpack.c.0.s8 %v99
  %v101 = vperm.slane %v86, %v100
  %v103 = vunpack.c.l.s4 1987475062
  %v104 = vunpack.c.0.s8 %v103
  %v105 = vperm.slane %v86, %v104
  %v107 = vunpack.c.l.s4 269488144
  %v108 = vunpack.c.0.s8 %v107
  %v109 = vperm.slane %v87, %v108
  %v111 = vunpack.c.l.s4 842150450
  %v112 = vunpack.c.0.s8 %v111
  %v113 = vperm.slane %v87, %v112
  %v115 = vunpack.c.l.s4 1414812756
  %v116 = vunpack.c.0.s8 %v115
  %v117 = vperm.slane %v87, %v116
  %v119 = vunpack.c.l.s4 1987475062
  %v120 = vunpack.c.0.s8 %v119
  %v121 = vperm.slane %v87, %v120
  %v130 = vsub.f32 %v37, %v93
  %v131 = vsub.f32 %v38, %v97
  %v132 = vsub.f32 %v39, %v101
  %v133 = vsub.f32 %v40, %v105
  %v134 = vsub.f32 %v41, %v109
  %v135 = vsub.f32 %v42, %v113
  %v136 = vsub.f32 %v43, %v117
  %v137 = vsub.f32 %v44, %v121
  %v138 = vmul.f32 %v130, %v130
  %v139 = vmul.f32 %v131, %v131
  %v140 = vmul.f32 %v132, %v132
  %v141 = vmul.f32 %v133, %v133
  %v142 = vmul.f32 %v134, %v134
  %v143 = vmul.f32 %v135, %v135
  %v144 = vmul.f32 %v136, %v136
  %v145 = vmul.f32 %v137, %v137
  %154 = vst [vmem:[#allocation1] ss:$4 sm:$0xff] %v138
  %s155 = scalar_lea.vmem [#allocation1], 1
  %156 = vst [vmem:[%s155] ss:$4 sm:$0xff] %v139
  %s157 = scalar_lea.vmem [#allocation1], 2
  %158 = vst [vmem:[%s157] ss:$4 sm:$0xff] %v140
  %s159 = scalar_lea.vmem [#allocation1], 3
  %160 = vst [vmem:[%s159] ss:$4 sm:$0xff] %v141
  %s161 = scalar_lea.vmem [#allocation1], 32
  %162 = vst [vmem:[%s161] ss:$4 sm:$0xff] %v142
  %s163 = scalar_lea.vmem [#allocation1], 33
  %164 = vst [vmem:[%s163] ss:$4 sm:$0xff] %v143
  %s165 = scalar_lea.vmem [#allocation1], 34
  %166 = vst [vmem:[%s165] ss:$4 sm:$0xff] %v144
  %s167 = scalar_lea.vmem [#allocation1], 35
  %168 = vst [vmem:[%s167] ss:$4 sm:$0xff] %v145
  %v169 = vld.sshfl [vmem:[#allocation1] sm:$0xff pattern:$0x73625140]
  %v170 = vld.sshfl [vmem:[#allocation1 + $0x20] sm:$0xff pattern:$0x73625140]
  %v173 = vsel %vm72, %v169, 0.0
  %174 = vadd.xlane.f32.xlu0 %v173
  %v175 = vpop.xlane.xlu0 %174
  %v176 = vsel %vm72, %v170, 0.0
  %177 = vadd.xlane.f32.xlu0 %v176
  %v178 = vpop.xlane.xlu0 %177
  %v179 = vmul.f32 %v175, %v85
  %v180 = vmul.f32 %v178, %v85
  %v181 = vadd.f32 %v179, 1e-05
  %v182 = vadd.f32 %v180, 1e-05
  %v183 = vrsqrt.pop %v181
  %v184 = vmul.f32 %v183, %v181
  %v185 = vmul.f32 %v184, %v183
  %v186 = vmul.f32 0.5, %v185
  %v187 = vsub.f32 1.5, %v186
  %v188 = vmul.f32 %v183, %v187
  %vm189 = vweird.f32 %v181
  %vm190 = vweird.f32 %v183
  %vm191 = vmor %vm189, %vm190
  %v192 = vsel %vm191, %v183, %v188
  %v193 = vrsqrt.pop %v182
  %v194 = vmul.f32 %v193, %v182
  %v195 = vmul.f32 %v194, %v193
  %v196 = vmul.f32 0.5, %v195
  %v197 = vsub.f32 1.5, %v196
  %v198 = vmul.f32 %v193, %v197
  %vm199 = vweird.f32 %v182
  %vm200 = vweird.f32 %v193
  %vm201 = vmor %vm199, %vm200
  %v202 = vsel %vm201, %v193, %v198
  %v206 = vunpack.c.l.s4 269488144
  %v207 = vunpack.c.0.s8 %v206
  %v208 = vperm.slane %v192, %v207
  %v210 = vunpack.c.l.s4 842150450
  %v211 = vunpack.c.0.s8 %v210
  %v212 = vperm.slane %v192, %v211
  %v214 = vunpack.c.l.s4 1414812756
  %v215 = vunpack.c.0.s8 %v214
  %v216 = vperm.slane %v192, %v215
  %v218 = vunpack.c.l.s4 1987475062
  %v219 = vunpack.c.0.s8 %v218
  %v220 = vperm.slane %v192, %v219
  %v222 = vunpack.c.l.s4 269488144
  %v223 = vunpack.c.0.s8 %v222
  %v224 = vperm.slane %v202, %v223
  %v226 = vunpack.c.l.s4 842150450
  %v227 = vunpack.c.0.s8 %v226
  %v228 = vperm.slane %v202, %v227
  %v230 = vunpack.c.l.s4 1414812756
  %v231 = vunpack.c.0.s8 %v230
  %v232 = vperm.slane %v202, %v231
  %v234 = vunpack.c.l.s4 1987475062
  %v235 = vunpack.c.0.s8 %v234
  %v236 = vperm.slane %v202, %v235
  %v245 = vmul.f32 %v130, %v208
  %v246 = vmul.f32 %v131, %v212
  %v247 = vmul.f32 %v132, %v216
  %v248 = vmul.f32 %v133, %v220
  %v249 = vmul.f32 %v134, %v224
  %v250 = vmul.f32 %v135, %v228
  %v251 = vmul.f32 %v136, %v232
  %v252 = vmul.f32 %v137, %v236
  %v254 = vrot.slane %v31, 2
  %v255 = vrot.slane %v31, 4
  %v256 = vrot.slane %v31, 6
  %v260 = vmul.f32 %v245, %v31
  %v261 = vmul.f32 %v246, %v254
  %v262 = vmul.f32 %v247, %v255
  %v263 = vmul.f32 %v248, %v256
  %v264 = vmul.f32 %v249, %v31
  %v265 = vmul.f32 %v250, %v254
  %v266 = vmul.f32 %v251, %v255
  %v267 = vmul.f32 %v252, %v256
  %v269 = vrot.slane %v32, 2
  %v270 = vrot.slane %v32, 4
  %v271 = vrot.slane %v32, 6
  %v275 = vadd.f32 %v260, %v32
  %v276 = vadd.f32 %v261, %v269
  %v277 = vadd.f32 %v262, %v270
  %v278 = vadd.f32 %v263, %v271
  %v279 = vadd.f32 %v264, %v32
  %v280 = vadd.f32 %v265, %v269
  %v281 = vadd.f32 %v266, %v270
  %v282 = vadd.f32 %v267, %v271
  %v283 = vld [vmem:[%s0] sm:$0x1]
  %v284 = vld [vmem:[%s0 + $0x1] sm:$0x1]
  %v285 = vld [vmem:[%s0 + $0x2] sm:$0x1]
  %v286 = vld [vmem:[%s0 + $0x3] sm:$0x1]
  %v287 = vld [vmem:[%s0 + $0x4] sm:$0x1]
  %v288 = vld [vmem:[%s0 + $0x5] sm:$0x1]
  %v289 = vld [vmem:[%s0 + $0x6] sm:$0x1]
  %v290 = vld [vmem:[%s0 + $0x7] sm:$0x1]
  %v291 = vld [vmem:[%s3] sm:$0xff]
  %v292 = vld [vmem:[%s3 + $0x8] sm:$0xff]
  %v293 = vld [vmem:[%s3 + $0x10] sm:$0xff]
  %v294 = vld [vmem:[%s3 + $0x18] sm:$0xff]
  %303 = vst [vmem:[#allocation1] ss:$4 sm:$0xff] %v275
  %s304 = scalar_lea.vmem [#allocation1], 1
  %305 = vst [vmem:[%s304] ss:$4 sm:$0xff] %v276
  %s306 = scalar_lea.vmem [#allocation1], 2
  %307 = vst [vmem:[%s306] ss:$4 sm:$0xff] %v277
  %s308 = scalar_lea.vmem [#allocation1], 3
  %309 = vst [vmem:[%s308] ss:$4 sm:$0xff] %v278
  %s310 = scalar_lea.vmem [#allocation1], 32
  %311 = vst [vmem:[%s310] ss:$4 sm:$0xff] %v279
  %s312 = scalar_lea.vmem [#allocation1], 33
  %313 = vst [vmem:[%s312] ss:$4 sm:$0xff] %v280
  %s314 = scalar_lea.vmem [#allocation1], 34
  %315 = vst [vmem:[%s314] ss:$4 sm:$0xff] %v281
  %s316 = scalar_lea.vmem [#allocation1], 35
  %317 = vst [vmem:[%s316] ss:$4 sm:$0xff] %v282
  %v318 = vld.sshfl [vmem:[#allocation1] sm:$0xff pattern:$0x73625140]
  %v319 = vld.sshfl [vmem:[#allocation1 + $0x20] sm:$0xff pattern:$0x73625140]
  %v322 = vpack.c.bf16 %v319, %v318
  %v323 = vld [vmem:[%s3 + $0x20] sm:$0xff]
  %v324 = vld [vmem:[%s3 + $0x28] sm:$0xff]
  %v327 = vunpack.c.l.b16 %v323
  %v328 = vunpack.c.h.b16 %v323
  %v329 = vunpack.c.l.b16 %v324
  %v330 = vunpack.c.h.b16 %v324
  %v331 = vpack.c.b16 %v329, %v327
  %v332 = vpack.c.b16 %v330, %v328
  %v334 = vsel %vm72, %v322, 0
  %vm336 = vcmask 1046528
  %vm337 = vcmask 1047552
  %v338 = vsel %vm336, 4294967295, 65535
  %v339 = vsel %vm337, %v338, 0
  %v341 = vand.u32 %v331, %v339
  %v344 = vand.u32 %v332, %v339
  %346 = vmatpush.bf16.msra.mxu0 0
  %347 = vmatpush.bf16.msra.mxu0 0
  %348 = vmatpush.bf16.msra.mxu0 0
  %349 = vmatpush.bf16.msra.mxu0 0
  %350 = vmatpush.bf16.msra.mxu0 0
  %351 = vmatpush.bf16.msra.mxu0 0
  %352 = vmatpush.bf16.msra.mxu0 0
  %353 = vmatpush.bf16.msra.mxu0 %v341
  %354 = vmatmul.bf16.gmra.mxu0 %v334
  %v355 = vpop.f32.mrf.mxu0
  %v356 = vadd.f32 0.0, %v355
  %v357 = vpop.f32.mrf.mxu0
  %v358 = vadd.f32 0.0, %v357
  %359 = vdwg.mxu0
  %360 = vmatpush.bf16.msra.mxu0 0
  %361 = vmatpush.bf16.msra.mxu0 0
  %362 = vmatpush.bf16.msra.mxu0 0
  %363 = vmatpush.bf16.msra.mxu0 0
  %364 = vmatpush.bf16.msra.mxu0 0
  %365 = vmatpush.bf16.msra.mxu0 0
  %366 = vmatpush.bf16.msra.mxu0 0
  %367 = vmatpush.bf16.msra.mxu0 %v344
  %368 = vmatmul.bf16.gmra.mxu0 %v334
  %v369 = vpop.f32.mrf.mxu0
  %v370 = vadd.f32 0.0, %v369
  %v371 = vpop.f32.mrf.mxu0
  %v372 = vadd.f32 0.0, %v371
  %373 = vdwg.mxu0
  %375 = vst [vmem:[#allocation1] ss:$9 sm:$0xff] %v283
  %s377 = scalar_lea.vmem [#allocation1], 1
  %378 = vst [vmem:[%s377] ss:$9 sm:$0xff] %v284
  %s380 = scalar_lea.vmem [#allocation1], 2
  %381 = vst [vmem:[%s380] ss:$9 sm:$0xff] %v285
  %s383 = scalar_lea.vmem [#allocation1], 3
  %384 = vst [vmem:[%s383] ss:$9 sm:$0xff] %v286
  %s386 = scalar_lea.vmem [#allocation1], 4
  %387 = vst [vmem:[%s386] ss:$9 sm:$0xff] %v287
  %s389 = scalar_lea.vmem [#allocation1], 5
  %390 = vst [vmem:[%s389] ss:$9 sm:$0xff] %v288
  %s392 = scalar_lea.vmem [#allocation1], 6
  %393 = vst [vmem:[%s392] ss:$9 sm:$0xff] %v289
  %s395 = scalar_lea.vmem [#allocation1], 7
  %396 = vst [vmem:[%s395] ss:$9 sm:$0xff] %v290
  %v397 = vld [vmem:[#allocation1] sm:$0xff]
  %v402 = vunpack.c.l.b16 %v291
  %v403 = vunpack.c.h.b16 %v291
  %v404 = vunpack.c.l.b16 %v292
  %v405 = vunpack.c.h.b16 %v292
  %v406 = vunpack.c.l.b16 %v293
  %v407 = vunpack.c.h.b16 %v293
  %v408 = vunpack.c.l.b16 %v294
  %v409 = vunpack.c.h.b16 %v294
  %v410 = vpack.c.b16 %v404, %v402
  %v411 = vpack.c.b16 %v405, %v403
  %v412 = vpack.c.b16 %v408, %v406
  %v413 = vpack.c.b16 %v409, %v407
  %vm418 = vcmask 261120
  %v419 = vsel %vm418, %v397, 0
  %421 = vmatpush.bf16.msra.mxu0 0
  %422 = vmatpush.bf16.msra.mxu0 0
  %423 = vmatpush.bf16.msra.mxu0 0
  %424 = vmatpush.bf16.msra.mxu0 0
  %425 = vmatpush.bf16.msra.mxu0 0
  %426 = vmatpush.bf16.msra.mxu0 0
  %427 = vmatpush.bf16.msra.mxu0 %v412
  %428 = vmatpush.bf16.msra.mxu0 %v410
  %429 = vmatmul.bf16.gmra.mxu0 %v419
  %v430 = vpop.f32.mrf.mxu0
  %v431 = vadd.f32 %v356, %v430
  %v432 = vpop.f32.mrf.mxu0
  %v433 = vadd.f32 %v358, %v432
  %434 = vdwg.mxu0
  %435 = vmatpush.bf16.msra.mxu0 0
  %436 = vmatpush.bf16.msra.mxu0 0
  %437 = vmatpush.bf16.msra.mxu0 0
  %438 = vmatpush.bf16.msra.mxu0 0
  %439 = vmatpush.bf16.msra.mxu0 0
  %440 = vmatpush.bf16.msra.mxu0 0
  %441 = vmatpush.bf16.msra.mxu0 %v413
  %442 = vmatpush.bf16.msra.mxu0 %v411
  %443 = vmatmul.bf16.gmra.mxu0 %v419
  %v444 = vpop.f32.mrf.mxu0
  %v445 = vadd.f32 %v370, %v444
  %v446 = vpop.f32.mrf.mxu0
  %v447 = vadd.f32 %v372, %v446
  %448 = vdwg.mxu0
  %v450 = vperm.slane %v30, 0
  %v451 = vperm.slane %v30, 1
  %v454 = vadd.f32 %v431, %v450
  %v455 = vadd.f32 %v445, %v451
  %v456 = vadd.f32 %v433, %v450
  %v457 = vadd.f32 %v447, %v451
  %v458 = vld [vmem:[%s4] sm:$0xff]
  %v459 = vld [vmem:[%s4 + $0x8] sm:$0xff]
  %v460 = vld [vmem:[%s4 + $0x10] sm:$0xff]
  %v461 = vld [vmem:[%s4 + $0x18] sm:$0xff]
  %v462 = vld [vmem:[%s2] sm:$0xf]
  %v463 = vld [vmem:[%s2 + $0x4] sm:$0xf]
  %v464 = vld [vmem:[%s2 + $0x8] sm:$0xf]
  %v465 = vld [vmem:[%s2 + $0xc] sm:$0xf]
  %v466 = vld [vmem:[%s2 + $0x10] sm:$0xf]
  %v467 = vld [vmem:[%s2 + $0x14] sm:$0xf]
  %v468 = vld [vmem:[%s2 + $0x18] sm:$0xf]
  %v469 = vld [vmem:[%s2 + $0x1c] sm:$0xf]
  %v470 = vlaneseq
  %v471 = vshrl.u32 %v470, 7
  %vm472 = vcmp.lt.s32.totalorder %v471, 2
  %v474 = vrot.slane %v457, 4
  %vm476 = vcmask 1041408
  %v477 = vsel %vm476, %v454, %v474
  %v482 = vunpack.c.l.b16 %v458
  %v483 = vunpack.c.h.b16 %v458
  %v484 = vunpack.c.l.b16 %v459
  %v485 = vunpack.c.h.b16 %v459
  %v486 = vunpack.c.l.b16 %v460
  %v487 = vunpack.c.h.b16 %v460
  %v488 = vunpack.c.l.b16 %v461
  %v489 = vunpack.c.h.b16 %v461
  %v490 = vpack.c.b16 %v484, %v482
  %v491 = vpack.c.b16 %v485, %v483
  %v492 = vpack.c.b16 %v488, %v486
  %v493 = vpack.c.b16 %v489, %v487
  %v499 = vsel %vm418, 0, 0
  %501 = vmatpush.bf16.msra.mxu0 0
  %502 = vmatpush.bf16.msra.mxu0 0
  %503 = vmatpush.bf16.msra.mxu0 0
  %504 = vmatpush.bf16.msra.mxu0 0
  %505 = vmatpush.bf16.msra.mxu0 0
  %506 = vmatpush.bf16.msra.mxu0 0
  %507 = vmatpush.bf16.msra.mxu0 %v492
  %508 = vmatpush.bf16.msra.mxu0 %v490
  %509 = vmatmul.bf16.gmra.mxu0 %v499
  %v510 = vpop.f32.mrf.mxu0
  %v511 = vadd.f32 0.0, %v510
  %v512 = vpop.f32.mrf.mxu0
  %513 = vdwg.mxu0
  %514 = vmatpush.bf16.msra.mxu0 0
  %515 = vmatpush.bf16.msra.mxu0 0
  %516 = vmatpush.bf16.msra.mxu0 0
  %517 = vmatpush.bf16.msra.mxu0 0
  %518 = vmatpush.bf16.msra.mxu0 0
  %519 = vmatpush.bf16.msra.mxu0 0
  %520 = vmatpush.bf16.msra.mxu0 %v493
  %521 = vmatpush.bf16.msra.mxu0 %v491
  %522 = vmatmul.bf16.gmra.mxu0 %v499
  %v523 = vpop.f32.mrf.mxu0
  %v524 = vadd.f32 0.0, %v523
  %v525 = vpop.f32.mrf.mxu0
  %526 = vdwg.mxu0
  %v527 = vsel %vm472, 1, 0
  %vm528 = vcmp.eq.s32.totalorder %v527, 1
  %v529 = vsel %vm528, %v511, %v524
  %v530 = vadd.f32 %v477, %v529
  %v531 = vxor.u32 %v530, 2147483648
  %v532 = vmul.f32 %v531, 1.442695
  %v533 = vpow.pop %v532
  %v534 = vadd.f32 %v533, 1.0
  %v535 = vrcp.pop %v534
  %v536 = vmul.f32 %v534, %v535
  %v537 = vsub.f32 1.0, %v536
  %v538 = vmul.f32 %v535, %v537
  %v539 = vadd.f32 %v535, %v538
  %vm540 = vweird.f32 %v534
  %vm541 = vweird.f32 %v535
  %vm542 = vmor %vm540, %vm541
  %v543 = vsel %vm542, %v535, %v539
  %v544 = vand.u32 2147483647, %v534
  %vm545 = vcmp.eq.f32.partialorder %v544, 8.507059e+37
  %v546 = vand.u32 %v534, 2147483648
  %v547 = vor.u32 1.1754944e-38, %v546
  %v548 = vsel %vm545, %v547, %v543
  %v549 = vmul.f32 1.0, %v548
  %v550 = vtanh.pop %v530
  %v551 = vmul.f32 %v549, 0.0
  %553 = vrot.lane.b32.xlu0 %v550, 64
  %v554 = vpop.permute.xlu0 %553
  %v556 = vmul.f32 %v549, %v554
  %558 = vrot.lane.b32.xlu0 %v556, 32
  %v559 = vpop.permute.xlu0 %558
  %v561 = vadd.f32 %v551, %v559
  %v562 = vtanh.pop %v561
  %564 = vrot.lane.b32.xlu0 %v562, 64
  %v565 = vpop.permute.xlu0 %564
  %v567 = vmul.f32 %v549, %v565
  %569 = vset.pattern.permute.xlu0 0
  %570 = vperm.xlu0 %569, %v462
  %v571 = vpop.permute.xlu0 %570
  %v573 = vmul.f32 %v571, %v567
  %v574 = vsub.f32 1.0, %v462
  %576 = vset.pattern.permute.xlu0 0
  %577 = vperm.xlu0 %576, %v574
  %v578 = vpop.permute.xlu0 %577
  %v580 = vmul.f32 %v578, 0.0
  %v581 = vadd.f32 %v573, %v580
  %v582 = vmul.f32 %v571, %v561
  %v583 = vadd.f32 %v582, %v580
  %v585 = vrot.slane %v454, 2
  %v587 = vrot.slane %v457, 2
  %v589 = vsel %vm476, %v585, %v587
  %v590 = vpack.c.bf16 %v581, %v581
  %592 = vrot.lane.b32.xlu0 %v590, 32
  %v593 = vpop.permute.xlu0 %592
  %v595 = vsel %vm418, %v593, 0
  %597 = vmatpush.bf16.msra.mxu0 0
  %598 = vmatpush.bf16.msra.mxu0 0
  %599 = vmatpush.bf16.msra.mxu0 0
  %600 = vmatpush.bf16.msra.mxu0 0
  %601 = vmatpush.bf16.msra.mxu0 0
  %602 = vmatpush.bf16.msra.mxu0 0
  %603 = vmatpush.bf16.msra.mxu0 %v492
  %604 = vmatpush.bf16.msra.mxu0 %v490
  %605 = vmatmul.bf16.gmra.mxu0 %v595
  %v606 = vpop.f32.mrf.mxu0
  %v607 = vadd.f32 0.0, %v606
  %v608 = vpop.f32.mrf.mxu0
  %609 = vdwg.mxu0
  %610 = vmatpush.bf16.msra.mxu0 0
  %611 = vmatpush.bf16.msra.mxu0 0
  %612 = vmatpush.bf16.msra.mxu0 0
  %613 = vmatpush.bf16.msra.mxu0 0
  %614 = vmatpush.bf16.msra.mxu0 0
  %615 = vmatpush.bf16.msra.mxu0 0
  %616 = vmatpush.bf16.msra.mxu0 %v493
  %617 = vmatpush.bf16.msra.mxu0 %v491
  %618 = vmatmul.bf16.gmra.mxu0 %v595
  %v619 = vpop.f32.mrf.mxu0
  %v620 = vadd.f32 0.0, %v619
  %v621 = vpop.f32.mrf.mxu0
  %622 = vdwg.mxu0
  %v623 = vsel %vm528, %v607, %v620
  %v624 = vadd.f32 %v589, %v623
  %v625 = vxor.u32 %v624, 2147483648
  %v626 = vmul.f32 %v625, 1.442695
  %v627 = vpow.pop %v626
  %v628 = vadd.f32 %v627, 1.0
  %v629 = vrcp.pop %v628
  %v630 = vmul.f32 %v628, %v629
  %v631 = vsub.f32 1.0, %v630
  %v632 = vmul.f32 %v629, %v631
  %v633 = vadd.f32 %v629, %v632
  %vm634 = vweird.f32 %v628
  %vm635 = vweird.f32 %v629
  %vm636 = vmor %vm634, %vm635
  %v637 = vsel %vm636, %v629, %v633
  %v638 = vand.u32 2147483647, %v628
  %vm639 = vcmp.eq.f32.partialorder %v638, 8.507059e+37
  %v640 = vand.u32 %v628, 2147483648
  %v641 = vor.u32 1.1754944e-38, %v640
  %v642 = vsel %vm639, %v641, %v637
  %v643 = vmul.f32 1.0, %v642
  %v644 = vtanh.pop %v624
  %v645 = vmul.f32 %v643, %v583
  %647 = vrot.lane.b32.xlu0 %v644, 64
  %v648 = vpop.permute.xlu0 %647
  %v650 = vmul.f32 %v643, %v648
  %652 = vrot.lane.b32.xlu0 %v650, 32
  %v653 = vpop.permute.xlu0 %652
  %v655 = vadd.f32 %v645, %v653
  %v656 = vtanh.pop %v655
  %658 = vrot.lane.b32.xlu0 %v656, 64
  %v659 = vpop.permute.xlu0 %658
  %v661 = vmul.f32 %v643, %v659
  %663 = vset.pattern.permute.xlu0 0
  %664 = vperm.xlu0 %663, %v463
  %v665 = vpop.permute.xlu0 %664
  %v667 = vmul.f32 %v665, %v661
  %v668 = vsub.f32 1.0, %v463
  %670 = vset.pattern.permute.xlu0 0
  %671 = vperm.xlu0 %670, %v668
  %v672 = vpop.permute.xlu0 %671
  %v674 = vmul.f32 %v672, %v581
  %v675 = vadd.f32 %v667, %v674
  %v676 = vmul.f32 %v665, %v655
  %v677 = vmul.f32 %v672, %v583
  %v678 = vadd.f32 %v676, %v677
  %v679 = vrot.slane %v454, 4
  %v681 = vsel %vm476, %v679, %v457
  %v682 = vpack.c.bf16 %v675, %v675
  %684 = vrot.lane.b32.xlu0 %v682, 32
  %v685 = vpop.permute.xlu0 %684
  %v687 = vsel %vm418, %v685, 0
  %689 = vmatpush.bf16.msra.mxu0 0
  %690 = vmatpush.bf16.msra.mxu0 0
  %691 = vmatpush.bf16.msra.mxu0 0
  %692 = vmatpush.bf16.msra.mxu0 0
  %693 = vmatpush.bf16.msra.mxu0 0
  %694 = vmatpush.bf16.msra.mxu0 0
  %695 = vmatpush.bf16.msra.mxu0 %v492
  %696 = vmatpush.bf16.msra.mxu0 %v490
  %697 = vmatmul.bf16.gmra.mxu0 %v687
  %v698 = vpop.f32.mrf.mxu0
  %v699 = vadd.f32 0.0, %v698
  %v700 = vpop.f32.mrf.mxu0
  %701 = vdwg.mxu0
  %702 = vmatpush.bf16.msra.mxu0 0
  %703 = vmatpush.bf16.msra.mxu0 0
  %704 = vmatpush.bf16.msra.mxu0 0
  %705 = vmatpush.bf16.msra.mxu0 0
  %706 = vmatpush.bf16.msra.mxu0 0
  %707 = vmatpush.bf16.msra.mxu0 0
  %708 = vmatpush.bf16.msra.mxu0 %v493
  %709 = vmatpush.bf16.msra.mxu0 %v491
  %710 = vmatmul.bf16.gmra.mxu0 %v687
  %v711 = vpop.f32.mrf.mxu0
  %v712 = vadd.f32 0.0, %v711
  %v713 = vpop.f32.mrf.mxu0
  %714 = vdwg.mxu0
  %v715 = vsel %vm528, %v699, %v712
  %v716 = vadd.f32 %v681, %v715
  %v717 = vxor.u32 %v716, 2147483648
  %v718 = vmul.f32 %v717, 1.442695
  %v719 = vpow.pop %v718
  %v720 = vadd.f32 %v719, 1.0
  %v721 = vrcp.pop %v720
  %v722 = vmul.f32 %v720, %v721
  %v723 = vsub.f32 1.0, %v722
  %v724 = vmul.f32 %v721, %v723
  %v725 = vadd.f32 %v721, %v724
  %vm726 = vweird.f32 %v720
  %vm727 = vweird.f32 %v721
  %vm728 = vmor %vm726, %vm727
  %v729 = vsel %vm728, %v721, %v725
  %v730 = vand.u32 2147483647, %v720
  %vm731 = vcmp.eq.f32.partialorder %v730, 8.507059e+37
  %v732 = vand.u32 %v720, 2147483648
  %v733 = vor.u32 1.1754944e-38, %v732
  %v734 = vsel %vm731, %v733, %v729
  %v735 = vmul.f32 1.0, %v734
  %v736 = vtanh.pop %v716
  %v737 = vmul.f32 %v735, %v678
  %739 = vrot.lane.b32.xlu0 %v736, 64
  %v740 = vpop.permute.xlu0 %739
  %v742 = vmul.f32 %v735, %v740
  %744 = vrot.lane.b32.xlu0 %v742, 32
  %v745 = vpop.permute.xlu0 %744
  %v747 = vadd.f32 %v737, %v745
  %v748 = vtanh.pop %v747
  %750 = vrot.lane.b32.xlu0 %v748, 64
  %v751 = vpop.permute.xlu0 %750
  %v753 = vmul.f32 %v735, %v751
  %755 = vset.pattern.permute.xlu0 0
  %756 = vperm.xlu0 %755, %v464
  %v757 = vpop.permute.xlu0 %756
  %v759 = vmul.f32 %v757, %v753
  %v760 = vsub.f32 1.0, %v464
  %762 = vset.pattern.permute.xlu0 0
  %763 = vperm.xlu0 %762, %v760
  %v764 = vpop.permute.xlu0 %763
  %v766 = vmul.f32 %v764, %v675
  %v767 = vadd.f32 %v759, %v766
  %v768 = vmul.f32 %v757, %v747
  %v769 = vmul.f32 %v764, %v678
  %v770 = vadd.f32 %v768, %v769
  %v771 = vrot.slane %v454, 6
  %v773 = vrot.slane %v457, 6
  %v775 = vsel %vm476, %v771, %v773
  %v776 = vpack.c.bf16 %v767, %v767
  %778 = vrot.lane.b32.xlu0 %v776, 32
  %v779 = vpop.permute.xlu0 %778
  %v781 = vsel %vm418, %v779, 0
  %783 = vmatpush.bf16.msra.mxu0 0
  %784 = vmatpush.bf16.msra.mxu0 0
  %785 = vmatpush.bf16.msra.mxu0 0
  %786 = vmatpush.bf16.msra.mxu0 0
  %787 = vmatpush.bf16.msra.mxu0 0
  %788 = vmatpush.bf16.msra.mxu0 0
  %789 = vmatpush.bf16.msra.mxu0 %v492
  %790 = vmatpush.bf16.msra.mxu0 %v490
  %791 = vmatmul.bf16.gmra.mxu0 %v781
  %v792 = vpop.f32.mrf.mxu0
  %v793 = vadd.f32 0.0, %v792
  %v794 = vpop.f32.mrf.mxu0
  %795 = vdwg.mxu0
  %796 = vmatpush.bf16.msra.mxu0 0
  %797 = vmatpush.bf16.msra.mxu0 0
  %798 = vmatpush.bf16.msra.mxu0 0
  %799 = vmatpush.bf16.msra.mxu0 0
  %800 = vmatpush.bf16.msra.mxu0 0
  %801 = vmatpush.bf16.msra.mxu0 0
  %802 = vmatpush.bf16.msra.mxu0 %v493
  %803 = vmatpush.bf16.msra.mxu0 %v491
  %804 = vmatmul.bf16.gmra.mxu0 %v781
  %v805 = vpop.f32.mrf.mxu0
  %v806 = vadd.f32 0.0, %v805
  %v807 = vpop.f32.mrf.mxu0
  %808 = vdwg.mxu0
  %v809 = vsel %vm528, %v793, %v806
  %v810 = vadd.f32 %v775, %v809
  %v811 = vxor.u32 %v810, 2147483648
  %v812 = vmul.f32 %v811, 1.442695
  %v813 = vpow.pop %v812
  %v814 = vadd.f32 %v813, 1.0
  %v815 = vrcp.pop %v814
  %v816 = vmul.f32 %v814, %v815
  %v817 = vsub.f32 1.0, %v816
  %v818 = vmul.f32 %v815, %v817
  %v819 = vadd.f32 %v815, %v818
  %vm820 = vweird.f32 %v814
  %vm821 = vweird.f32 %v815
  %vm822 = vmor %vm820, %vm821
  %v823 = vsel %vm822, %v815, %v819
  %v824 = vand.u32 2147483647, %v814
  %vm825 = vcmp.eq.f32.partialorder %v824, 8.507059e+37
  %v826 = vand.u32 %v814, 2147483648
  %v827 = vor.u32 1.1754944e-38, %v826
  %v828 = vsel %vm825, %v827, %v823
  %v829 = vmul.f32 1.0, %v828
  %v830 = vtanh.pop %v810
  %v831 = vmul.f32 %v829, %v770
  %833 = vrot.lane.b32.xlu0 %v830, 64
  %v834 = vpop.permute.xlu0 %833
  %v836 = vmul.f32 %v829, %v834
  %838 = vrot.lane.b32.xlu0 %v836, 32
  %v839 = vpop.permute.xlu0 %838
  %v841 = vadd.f32 %v831, %v839
  %v842 = vtanh.pop %v841
  %844 = vrot.lane.b32.xlu0 %v842, 64
  %v845 = vpop.permute.xlu0 %844
  %v847 = vmul.f32 %v829, %v845
  %849 = vset.pattern.permute.xlu0 0
  %850 = vperm.xlu0 %849, %v465
  %v851 = vpop.permute.xlu0 %850
  %v853 = vmul.f32 %v851, %v847
  %v854 = vsub.f32 1.0, %v465
  %856 = vset.pattern.permute.xlu0 0
  %857 = vperm.xlu0 %856, %v854
  %v858 = vpop.permute.xlu0 %857
  %v860 = vmul.f32 %v858, %v767
  %v861 = vadd.f32 %v853, %v860
  %v862 = vmul.f32 %v851, %v841
  %v863 = vmul.f32 %v858, %v770
  %v864 = vadd.f32 %v862, %v863
  %v866 = vrot.slane %v455, 4
  %v868 = vsel %vm476, %v456, %v866
  %v869 = vpack.c.bf16 %v861, %v861
  %871 = vrot.lane.b32.xlu0 %v869, 32
  %v872 = vpop.permute.xlu0 %871
  %v874 = vsel %vm418, %v872, 0
  %876 = vmatpush.bf16.msra.mxu0 0
  %877 = vmatpush.bf16.msra.mxu0 0
  %878 = vmatpush.bf16.msra.mxu0 0
  %879 = vmatpush.bf16.msra.mxu0 0
  %880 = vmatpush.bf16.msra.mxu0 0
  %881 = vmatpush.bf16.msra.mxu0 0
  %882 = vmatpush.bf16.msra.mxu0 %v492
  %883 = vmatpush.bf16.msra.mxu0 %v490
  %884 = vmatmul.bf16.gmra.mxu0 %v874
  %v885 = vpop.f32.mrf.mxu0
  %v886 = vadd.f32 0.0, %v885
  %v887 = vpop.f32.mrf.mxu0
  %888 = vdwg.mxu0
  %889 = vmatpush.bf16.msra.mxu0 0
  %890 = vmatpush.bf16.msra.mxu0 0
  %891 = vmatpush.bf16.msra.mxu0 0
  %892 = vmatpush.bf16.msra.mxu0 0
  %893 = vmatpush.bf16.msra.mxu0 0
  %894 = vmatpush.bf16.msra.mxu0 0
  %895 = vmatpush.bf16.msra.mxu0 %v493
  %896 = vmatpush.bf16.msra.mxu0 %v491
  %897 = vmatmul.bf16.gmra.mxu0 %v874
  %v898 = vpop.f32.mrf.mxu0
  %v899 = vadd.f32 0.0, %v898
  %v900 = vpop.f32.mrf.mxu0
  %901 = vdwg.mxu0
  %v902 = vsel %vm528, %v886, %v899
  %v903 = vadd.f32 %v868, %v902
  %v904 = vxor.u32 %v903, 2147483648
  %v905 = vmul.f32 %v904, 1.442695
  %v906 = vpow.pop %v905
  %v907 = vadd.f32 %v906, 1.0
  %v908 = vrcp.pop %v907
  %v909 = vmul.f32 %v907, %v908
  %v910 = vsub.f32 1.0, %v909
  %v911 = vmul.f32 %v908, %v910
  %v912 = vadd.f32 %v908, %v911
  %vm913 = vweird.f32 %v907
  %vm914 = vweird.f32 %v908
  %vm915 = vmor %vm913, %vm914
  %v916 = vsel %vm915, %v908, %v912
  %v917 = vand.u32 2147483647, %v907
  %vm918 = vcmp.eq.f32.partialorder %v917, 8.507059e+37
  %v919 = vand.u32 %v907, 2147483648
  %v920 = vor.u32 1.1754944e-38, %v919
  %v921 = vsel %vm918, %v920, %v916
  %v922 = vmul.f32 1.0, %v921
  %v923 = vtanh.pop %v903
  %v924 = vmul.f32 %v922, %v864
  %926 = vrot.lane.b32.xlu0 %v923, 64
  %v927 = vpop.permute.xlu0 %926
  %v929 = vmul.f32 %v922, %v927
  %931 = vrot.lane.b32.xlu0 %v929, 32
  %v932 = vpop.permute.xlu0 %931
  %v934 = vadd.f32 %v924, %v932
  %v935 = vtanh.pop %v934
  %937 = vrot.lane.b32.xlu0 %v935, 64
  %v938 = vpop.permute.xlu0 %937
  %v940 = vmul.f32 %v922, %v938
  %942 = vset.pattern.permute.xlu0 0
  %943 = vperm.xlu0 %942, %v466
  %v944 = vpop.permute.xlu0 %943
  %v946 = vmul.f32 %v944, %v940
  %v947 = vsub.f32 1.0, %v466
  %949 = vset.pattern.permute.xlu0 0
  %950 = vperm.xlu0 %949, %v947
  %v951 = vpop.permute.xlu0 %950
  %v953 = vmul.f32 %v951, %v861
  %v954 = vadd.f32 %v946, %v953
  %v955 = vmul.f32 %v944, %v934
  %v956 = vmul.f32 %v951, %v864
  %v957 = vadd.f32 %v955, %v956
  %v959 = vrot.slane %v456, 2
  %v961 = vrot.slane %v455, 2
  %v963 = vsel %vm476, %v959, %v961
  %v964 = vpack.c.bf16 %v954, %v954
  %966 = vrot.lane.b32.xlu0 %v964, 32
  %v967 = vpop.permute.xlu0 %966
  %v969 = vsel %vm418, %v967, 0
  %971 = vmatpush.bf16.msra.mxu0 0
  %972 = vmatpush.bf16.msra.mxu0 0
  %973 = vmatpush.bf16.msra.mxu0 0
  %974 = vmatpush.bf16.msra.mxu0 0
  %975 = vmatpush.bf16.msra.mxu0 0
  %976 = vmatpush.bf16.msra.mxu0 0
  %977 = vmatpush.bf16.msra.mxu0 %v492
  %978 = vmatpush.bf16.msra.mxu0 %v490
  %979 = vmatmul.bf16.gmra.mxu0 %v969
  %v980 = vpop.f32.mrf.mxu0
  %v981 = vadd.f32 0.0, %v980
  %v982 = vpop.f32.mrf.mxu0
  %983 = vdwg.mxu0
  %984 = vmatpush.bf16.msra.mxu0 0
  %985 = vmatpush.bf16.msra.mxu0 0
  %986 = vmatpush.bf16.msra.mxu0 0
  %987 = vmatpush.bf16.msra.mxu0 0
  %988 = vmatpush.bf16.msra.mxu0 0
  %989 = vmatpush.bf16.msra.mxu0 0
  %990 = vmatpush.bf16.msra.mxu0 %v493
  %991 = vmatpush.bf16.msra.mxu0 %v491
  %992 = vmatmul.bf16.gmra.mxu0 %v969
  %v993 = vpop.f32.mrf.mxu0
  %v994 = vadd.f32 0.0, %v993
  %v995 = vpop.f32.mrf.mxu0
  %996 = vdwg.mxu0
  %v997 = vsel %vm528, %v981, %v994
  %v998 = vadd.f32 %v963, %v997
  %v999 = vxor.u32 %v998, 2147483648
  %v1000 = vmul.f32 %v999, 1.442695
  %v1001 = vpow.pop %v1000
  %v1002 = vadd.f32 %v1001, 1.0
  %v1003 = vrcp.pop %v1002
  %v1004 = vmul.f32 %v1002, %v1003
  %v1005 = vsub.f32 1.0, %v1004
  %v1006 = vmul.f32 %v1003, %v1005
  %v1007 = vadd.f32 %v1003, %v1006
  %vm1008 = vweird.f32 %v1002
  %vm1009 = vweird.f32 %v1003
  %vm1010 = vmor %vm1008, %vm1009
  %v1011 = vsel %vm1010, %v1003, %v1007
  %v1012 = vand.u32 2147483647, %v1002
  %vm1013 = vcmp.eq.f32.partialorder %v1012, 8.507059e+37
  %v1014 = vand.u32 %v1002, 2147483648
  %v1015 = vor.u32 1.1754944e-38, %v1014
  %v1016 = vsel %vm1013, %v1015, %v1011
  %v1017 = vmul.f32 1.0, %v1016
  %v1018 = vtanh.pop %v998
  %v1019 = vmul.f32 %v1017, %v957
  %1021 = vrot.lane.b32.xlu0 %v1018, 64
  %v1022 = vpop.permute.xlu0 %1021
  %v1024 = vmul.f32 %v1017, %v1022
  %1026 = vrot.lane.b32.xlu0 %v1024, 32
  %v1027 = vpop.permute.xlu0 %1026
  %v1029 = vadd.f32 %v1019, %v1027
  %v1030 = vtanh.pop %v1029
  %1032 = vrot.lane.b32.xlu0 %v1030, 64
  %v1033 = vpop.permute.xlu0 %1032
  %v1035 = vmul.f32 %v1017, %v1033
  %1037 = vset.pattern.permute.xlu0 0
  %1038 = vperm.xlu0 %1037, %v467
  %v1039 = vpop.permute.xlu0 %1038
  %v1041 = vmul.f32 %v1039, %v1035
  %v1042 = vsub.f32 1.0, %v467
  %1044 = vset.pattern.permute.xlu0 0
  %1045 = vperm.xlu0 %1044, %v1042
  %v1046 = vpop.permute.xlu0 %1045
  %v1048 = vmul.f32 %v1046, %v954
  %v1049 = vadd.f32 %v1041, %v1048
  %v1050 = vmul.f32 %v1039, %v1029
  %v1051 = vmul.f32 %v1046, %v957
  %v1052 = vadd.f32 %v1050, %v1051
  %v1053 = vrot.slane %v456, 4
  %v1055 = vsel %vm476, %v1053, %v455
  %v1056 = vpack.c.bf16 %v1049, %v1049
  %1058 = vrot.lane.b32.xlu0 %v1056, 32
  %v1059 = vpop.permute.xlu0 %1058
  %v1061 = vsel %vm418, %v1059, 0
  %1063 = vmatpush.bf16.msra.mxu0 0
  %1064 = vmatpush.bf16.msra.mxu0 0
  %1065 = vmatpush.bf16.msra.mxu0 0
  %1066 = vmatpush.bf16.msra.mxu0 0
  %1067 = vmatpush.bf16.msra.mxu0 0
  %1068 = vmatpush.bf16.msra.mxu0 0
  %1069 = vmatpush.bf16.msra.mxu0 %v492
  %1070 = vmatpush.bf16.msra.mxu0 %v490
  %1071 = vmatmul.bf16.gmra.mxu0 %v1061
  %v1072 = vpop.f32.mrf.mxu0
  %v1073 = vadd.f32 0.0, %v1072
  %v1074 = vpop.f32.mrf.mxu0
  %1075 = vdwg.mxu0
  %1076 = vmatpush.bf16.msra.mxu0 0
  %1077 = vmatpush.bf16.msra.mxu0 0
  %1078 = vmatpush.bf16.msra.mxu0 0
  %1079 = vmatpush.bf16.msra.mxu0 0
  %1080 = vmatpush.bf16.msra.mxu0 0
  %1081 = vmatpush.bf16.msra.mxu0 0
  %1082 = vmatpush.bf16.msra.mxu0 %v493
  %1083 = vmatpush.bf16.msra.mxu0 %v491
  %1084 = vmatmul.bf16.gmra.mxu0 %v1061
  %v1085 = vpop.f32.mrf.mxu0
  %v1086 = vadd.f32 0.0, %v1085
  %v1087 = vpop.f32.mrf.mxu0
  %1088 = vdwg.mxu0
  %v1089 = vsel %vm528, %v1073, %v1086
  %v1090 = vadd.f32 %v1055, %v1089
  %v1091 = vxor.u32 %v1090, 2147483648
  %v1092 = vmul.f32 %v1091, 1.442695
  %v1093 = vpow.pop %v1092
  %v1094 = vadd.f32 %v1093, 1.0
  %v1095 = vrcp.pop %v1094
  %v1096 = vmul.f32 %v1094, %v1095
  %v1097 = vsub.f32 1.0, %v1096
  %v1098 = vmul.f32 %v1095, %v1097
  %v1099 = vadd.f32 %v1095, %v1098
  %vm1100 = vweird.f32 %v1094
  %vm1101 = vweird.f32 %v1095
  %vm1102 = vmor %vm1100, %vm1101
  %v1103 = vsel %vm1102, %v1095, %v1099
  %v1104 = vand.u32 2147483647, %v1094
  %vm1105 = vcmp.eq.f32.partialorder %v1104, 8.507059e+37
  %v1106 = vand.u32 %v1094, 2147483648
  %v1107 = vor.u32 1.1754944e-38, %v1106
  %v1108 = vsel %vm1105, %v1107, %v1103
  %v1109 = vmul.f32 1.0, %v1108
  %v1110 = vtanh.pop %v1090
  %v1111 = vmul.f32 %v1109, %v1052
  %1113 = vrot.lane.b32.xlu0 %v1110, 64
  %v1114 = vpop.permute.xlu0 %1113
  %v1116 = vmul.f32 %v1109, %v1114
  %1118 = vrot.lane.b32.xlu0 %v1116, 32
  %v1119 = vpop.permute.xlu0 %1118
  %v1121 = vadd.f32 %v1111, %v1119
  %v1122 = vtanh.pop %v1121
  %1124 = vrot.lane.b32.xlu0 %v1122, 64
  %v1125 = vpop.permute.xlu0 %1124
  %v1127 = vmul.f32 %v1109, %v1125
  %1129 = vset.pattern.permute.xlu0 0
  %1130 = vperm.xlu0 %1129, %v468
  %v1131 = vpop.permute.xlu0 %1130
  %v1133 = vmul.f32 %v1131, %v1127
  %v1134 = vsub.f32 1.0, %v468
  %1136 = vset.pattern.permute.xlu0 0
  %1137 = vperm.xlu0 %1136, %v1134
  %v1138 = vpop.permute.xlu0 %1137
  %v1140 = vmul.f32 %v1138, %v1049
  %v1141 = vadd.f32 %v1133, %v1140
  %v1142 = vmul.f32 %v1131, %v1121
  %v1143 = vmul.f32 %v1138, %v1052
  %v1144 = vadd.f32 %v1142, %v1143
  %v1145 = vrot.slane %v456, 6
  %v1147 = vrot.slane %v455, 6
  %v1149 = vsel %vm476, %v1145, %v1147
  %v1150 = vpack.c.bf16 %v1141, %v1141
  %1152 = vrot.lane.b32.xlu0 %v1150, 32
  %v1153 = vpop.permute.xlu0 %1152
  %v1155 = vsel %vm418, %v1153, 0
  %1157 = vmatpush.bf16.msra.mxu0 0
  %1158 = vmatpush.bf16.msra.mxu0 0
  %1159 = vmatpush.bf16.msra.mxu0 0
  %1160 = vmatpush.bf16.msra.mxu0 0
  %1161 = vmatpush.bf16.msra.mxu0 0
  %1162 = vmatpush.bf16.msra.mxu0 0
  %1163 = vmatpush.bf16.msra.mxu0 %v492
  %1164 = vmatpush.bf16.msra.mxu0 %v490
  %1165 = vmatmul.bf16.gmra.mxu0 %v1155
  %v1166 = vpop.f32.mrf.mxu0
  %v1167 = vadd.f32 0.0, %v1166
  %v1168 = vpop.f32.mrf.mxu0
  %1169 = vdwg.mxu0
  %1170 = vmatpush.bf16.msra.mxu0 0
  %1171 = vmatpush.bf16.msra.mxu0 0
  %1172 = vmatpush.bf16.msra.mxu0 0
  %1173 = vmatpush.bf16.msra.mxu0 0
  %1174 = vmatpush.bf16.msra.mxu0 0
  %1175 = vmatpush.bf16.msra.mxu0 0
  %1176 = vmatpush.bf16.msra.mxu0 %v493
  %1177 = vmatpush.bf16.msra.mxu0 %v491
  %1178 = vmatmul.bf16.gmra.mxu0 %v1155
  %v1179 = vpop.f32.mrf.mxu0
  %v1180 = vadd.f32 0.0, %v1179
  %v1181 = vpop.f32.mrf.mxu0
  %1182 = vdwg.mxu0
  %v1183 = vsel %vm528, %v1167, %v1180
  %v1184 = vadd.f32 %v1149, %v1183
  %v1185 = vxor.u32 %v1184, 2147483648
  %v1186 = vmul.f32 %v1185, 1.442695
  %v1187 = vpow.pop %v1186
  %v1188 = vadd.f32 %v1187, 1.0
  %v1189 = vrcp.pop %v1188
  %v1190 = vmul.f32 %v1188, %v1189
  %v1191 = vsub.f32 1.0, %v1190
  %v1192 = vmul.f32 %v1189, %v1191
  %v1193 = vadd.f32 %v1189, %v1192
  %vm1194 = vweird.f32 %v1188
  %vm1195 = vweird.f32 %v1189
  %vm1196 = vmor %vm1194, %vm1195
  %v1197 = vsel %vm1196, %v1189, %v1193
  %v1198 = vand.u32 2147483647, %v1188
  %vm1199 = vcmp.eq.f32.partialorder %v1198, 8.507059e+37
  %v1200 = vand.u32 %v1188, 2147483648
  %v1201 = vor.u32 1.1754944e-38, %v1200
  %v1202 = vsel %vm1199, %v1201, %v1197
  %v1203 = vmul.f32 1.0, %v1202
  %v1204 = vtanh.pop %v1184
  %v1205 = vmul.f32 %v1203, %v1144
  %1207 = vrot.lane.b32.xlu0 %v1204, 64
  %v1208 = vpop.permute.xlu0 %1207
  %v1210 = vmul.f32 %v1203, %v1208
  %1212 = vrot.lane.b32.xlu0 %v1210, 32
  %v1213 = vpop.permute.xlu0 %1212
  %v1215 = vadd.f32 %v1205, %v1213
  %v1216 = vtanh.pop %v1215
  %1218 = vrot.lane.b32.xlu0 %v1216, 64
  %v1219 = vpop.permute.xlu0 %1218
  %v1221 = vmul.f32 %v1203, %v1219
  %1223 = vset.pattern.permute.xlu0 0
  %1224 = vperm.xlu0 %1223, %v469
  %v1225 = vpop.permute.xlu0 %1224
  %v1227 = vmul.f32 %v1225, %v1221
  %v1229 = vrot.slane %v667, 6
  %v1232 = vrot.slane %v759, 4
  %v1235 = vrot.slane %v853, 2
  %v1238 = vrot.slane %v1041, 6
  %v1241 = vrot.slane %v1133, 4
  %v1244 = vrot.slane %v1227, 2
  %v1246 = vsel %vm476, %v573, %v1229
  %vm1247 = vcmask 1043456
  %v1248 = vsel %vm1247, %v1246, %v1232
  %vm1249 = vcmask 1045504
  %v1250 = vsel %vm1249, %v1248, %v1235
  %v1251 = vsel %vm476, %v946, %v1238
  %v1252 = vsel %vm1247, %v1251, %v1241
  %v1253 = vsel %vm1249, %v1252, %v1244
  %v1255 = vrot.slane %v946, 4
  %v1258 = vrot.slane %v573, 4
  %v1260 = vsel %vm476, %v1244, %v1133
  %v1261 = vsel %vm1247, %v1260, %v1238
  %v1262 = vsel %vm1249, %v1261, %v1255
  %v1263 = vsel %vm476, %v1235, %v759
  %v1264 = vsel %vm1247, %v1263, %v1229
  %v1265 = vsel %vm1249, %v1264, %v1258
  %1268 = vrot.lane.b32.xlu0 %v1250, 32
  %v1269 = vpop.permute.xlu0 %1268
  %1270 = vrot.lane.b32.xlu0 %v1253, 32
  %v1271 = vpop.permute.xlu0 %1270
  %1276 = vrot.lane.b32.xlu0 %v1262, 64
  %v1277 = vpop.permute.xlu0 %1276
  %1278 = vrot.lane.b32.xlu0 %v1265, 64
  %v1279 = vpop.permute.xlu0 %1278
  %v1282 = vsel %vm418, %v1269, %v1277
  %v1283 = vsel %vm418, %v1271, %v1279
  %v1284 = vpack.c.bf16 %v1283, %v1282
  %v1285 = vld [vmem:[%s5] sm:$0xf]
  %v1286 = vld [vmem:[%s5 + $0x4] sm:$0xf]
  %v1287 = vld [vmem:[%s5 + $0x8] sm:$0xf]
  %v1288 = vld [vmem:[%s5 + $0xc] sm:$0xf]
  %v1289 = vld [vmem:[%s5 + $0x10] sm:$0xf]
  %v1290 = vld [vmem:[%s5 + $0x14] sm:$0xf]
  %v1291 = vld [vmem:[%s5 + $0x18] sm:$0xf]
  %v1292 = vld [vmem:[%s5 + $0x1c] sm:$0xf]
  %v1301 = vunpack.c.l.b16 %v1285
  %v1302 = vunpack.c.l.b16 %v1286
  %v1303 = vunpack.c.l.b16 %v1287
  %v1304 = vunpack.c.l.b16 %v1288
  %v1305 = vunpack.c.l.b16 %v1289
  %v1306 = vunpack.c.l.b16 %v1290
  %v1307 = vunpack.c.l.b16 %v1291
  %v1308 = vunpack.c.l.b16 %v1292
  %v1309 = vpack.c.b16 %v1302, %v1301
  %v1310 = vpack.c.b16 %v1304, %v1303
  %v1311 = vpack.c.b16 %v1306, %v1305
  %v1312 = vpack.c.b16 %v1308, %v1307
  %vm1317 = vcmask 523264
  %v1319 = vsel %vm1317, %v1284, 0
  %1321 = vmatpush.bf16.msra.mxu0 0
  %1322 = vmatpush.bf16.msra.mxu0 0
  %1323 = vmatpush.bf16.msra.mxu0 0
  %1324 = vmatpush.bf16.msra.mxu0 0
  %1325 = vmatpush.bf16.msra.mxu0 %v1312
  %1326 = vmatpush.bf16.msra.mxu0 %v1311
  %1327 = vmatpush.bf16.msra.mxu0 %v1310
  %1328 = vmatpush.bf16.msra.mxu0 %v1309
  %1329 = vmatmul.bf16.gmra.mxu0 %v1319
  %v1330 = vpop.f32.mrf.mxu0
  %v1331 = vadd.f32 %v33, %v1330
  %v1332 = vpop.f32.mrf.mxu0
  %v1333 = vadd.f32 %v33, %v1332
  %1334 = vdwg.mxu0
  %v1337 = vrot.slane %v1331, 2
  %v1338 = vrot.slane %v1331, 4
  %v1339 = vrot.slane %v1331, 6
  %v1340 = vrot.slane %v1333, 2
  %v1341 = vrot.slane %v1333, 4
  %v1342 = vrot.slane %v1333, 6
  %vm1349 = vcmask 33792
  %1350 = vst.msk [vmem:[%s7] sm:$0x3] %vm1349, %v1331
  %1351 = vst.msk [vmem:[%s7 + $0x2] sm:$0x3] %vm1349, %v1337
  %1352 = vst.msk [vmem:[%s7 + $0x4] sm:$0x3] %vm1349, %v1338
  %1353 = vst.msk [vmem:[%s7 + $0x6] sm:$0x3] %vm1349, %v1339
  %1354 = vst.msk [vmem:[%s7 + $0x8] sm:$0x3] %vm1349, %v1333
  %1355 = vst.msk [vmem:[%s7 + $0xa] sm:$0x3] %vm1349, %v1340
  %1356 = vst.msk [vmem:[%s7 + $0xc] sm:$0x3] %vm1349, %v1341
  %1357 = vst.msk [vmem:[%s7 + $0xe] sm:$0x3] %vm1349, %v1342
  %v1358 = vadd.f32 %v34, %v1331
  %1359 = vst.msk [vmem:[%s9] sm:$0x3] %vm1349, 0
  %v1360 = vperm.slane %v1358, 0
  %v1361 = vlaneseq
  %v1362 = vshrl.u32 %v1361, 7
  %1364 = vset.pattern.permute.xlu0 %v1362
  %1365 = vperm.xlu0 %1364, %v1360
  %v1366 = vpop.permute.xlu0 %1365
  %v1367 = vperm.slane %v1358, 1
  %v1368 = vlaneseq
  %v1369 = vshrl.u32 %v1368, 7
  %1371 = vset.pattern.permute.xlu0 %v1369
  %1372 = vperm.xlu0 %1371, %v1367
  %v1373 = vpop.permute.xlu0 %1372
  %v1374 = vadd.f32 %v1366, %v36
  %v1375 = vadd.f32 %v1373, %v36
  %1376 = vst [vmem:[#allocation1] sm:$0xff] %v1331
  %s1377 = scalar_lea.vmem [#allocation1], 2
  %v1378 = vld [vmem:[%s1377] ss:$9 sm:$0xff]
  %s1379 = scalar_lea.vmem [#allocation1], 3
  %v1380 = vld [vmem:[%s1379] ss:$9 sm:$0xff]
  %v1381 = vperm.slane %v1378, 0
  %v1382 = vperm.slane %v1380, 0
  %v1385 = vadd.f32 %v1374, %v1381
  %v1386 = vadd.f32 %v1375, %v1382
  %vm1387 = vcmask 36864
  %v1388 = vsel %vm1387, %v1385, -inf
  %v1389 = vrot.slane %v1388, 4
  %v1390 = vmax.f32 %v1388, %v1389
  %v1391 = vrot.slane %v1390, 2
  %v1392 = vmax.f32 %v1390, %v1391
  %v1393 = vrot.slane %v1392, 1
  %v1394 = vmax.f32 %v1392, %v1393
  %v1395 = vsel %vm1387, %v1386, -inf
  %v1396 = vrot.slane %v1395, 4
  %v1397 = vmax.f32 %v1395, %v1396
  %v1398 = vrot.slane %v1397, 2
  %v1399 = vmax.f32 %v1397, %v1398
  %v1400 = vrot.slane %v1399, 1
  %v1401 = vmax.f32 %v1399, %v1400
  %vm1402 = vcmp.eq.f32.partialorder %v1385, %v1394
  %vm1403 = vcmp.eq.f32.partialorder %v1386, %v1401
  %v1404 = vsel %vm1402, %v471, 5
  %v1405 = vsel %vm1403, %v471, 5
  %v1406 = vsel %vm1387, %v1404, 2147483647
  %v1407 = vrot.slane %v1406, 4
  %vm1408 = vcmp.lt.s32.totalorder %v1406, %v1407
  %v1409 = vsel %vm1408, %v1406, %v1407
  %v1410 = vrot.slane %v1409, 2
  %vm1411 = vcmp.lt.s32.totalorder %v1409, %v1410
  %v1412 = vsel %vm1411, %v1409, %v1410
  %v1413 = vrot.slane %v1412, 1
  %vm1414 = vcmp.lt.s32.totalorder %v1412, %v1413
  %v1415 = vsel %vm1414, %v1412, %v1413
  %v1416 = vsel %vm1387, %v1405, 2147483647
  %v1417 = vrot.slane %v1416, 4
  %vm1418 = vcmp.lt.s32.totalorder %v1416, %v1417
  %v1419 = vsel %vm1418, %v1416, %v1417
  %v1420 = vrot.slane %v1419, 2
  %vm1421 = vcmp.lt.s32.totalorder %v1419, %v1420
  %v1422 = vsel %vm1421, %v1419, %v1420
  %v1423 = vrot.slane %v1422, 1
  %vm1424 = vcmp.lt.s32.totalorder %v1422, %v1423
  %v1425 = vsel %vm1424, %v1422, %v1423
  %vm1426 = vcmask 1041409
  %v1427 = vsel %vm1426, %v1425, %v1415
  %s1428 = scalar_lea.vmem %s9, 2
  %1429 = vst.msk [vmem:[%s1428] sm:$0x3] %vm1349, %v1427
  %v1432 = vsel %vm1426, %v1401, %v1394
  %v1434 = vmul.f32 %v665, %v1432
  %v1435 = vmul.f32 %v672, %v1358
  %v1436 = vadd.f32 %v1434, %v1435
  %v1437 = vperm.slane %v1436, 0
  %v1438 = vlaneseq
  %v1439 = vshrl.u32 %v1438, 7
  %1441 = vset.pattern.permute.xlu0 %v1439
  %1442 = vperm.xlu0 %1441, %v1437
  %v1443 = vpop.permute.xlu0 %1442
  %v1444 = vperm.slane %v1436, 1
  %v1445 = vlaneseq
  %v1446 = vshrl.u32 %v1445, 7
  %1448 = vset.pattern.permute.xlu0 %v1446
  %1449 = vperm.xlu0 %1448, %v1444
  %v1450 = vpop.permute.xlu0 %1449
  %v1451 = vadd.f32 %v1443, %v36
  %v1452 = vadd.f32 %v1450, %v36
  %1453 = vst [vmem:[#allocation1] sm:$0xff] %v1331
  %s1454 = scalar_lea.vmem [#allocation1], 4
  %v1455 = vld [vmem:[%s1454] ss:$9 sm:$0xff]
  %s1456 = scalar_lea.vmem [#allocation1], 5
  %v1457 = vld [vmem:[%s1456] ss:$9 sm:$0xff]
  %v1458 = vperm.slane %v1455, 0
  %v1459 = vperm.slane %v1457, 0
  %v1462 = vadd.f32 %v1451, %v1458
  %v1463 = vadd.f32 %v1452, %v1459
  %v1464 = vsel %vm1387, %v1462, -inf
  %v1465 = vrot.slane %v1464, 4
  %v1466 = vmax.f32 %v1464, %v1465
  %v1467 = vrot.slane %v1466, 2
  %v1468 = vmax.f32 %v1466, %v1467
  %v1469 = vrot.slane %v1468, 1
  %v1470 = vmax.f32 %v1468, %v1469
  %v1471 = vsel %vm1387, %v1463, -inf
  %v1472 = vrot.slane %v1471, 4
  %v1473 = vmax.f32 %v1471, %v1472
  %v1474 = vrot.slane %v1473, 2
  %v1475 = vmax.f32 %v1473, %v1474
  %v1476 = vrot.slane %v1475, 1
  %v1477 = vmax.f32 %v1475, %v1476
  %vm1478 = vcmp.eq.f32.partialorder %v1462, %v1470
  %vm1479 = vcmp.eq.f32.partialorder %v1463, %v1477
  %v1480 = vsel %vm1478, %v471, 5
  %v1481 = vsel %vm1479, %v471, 5
  %v1482 = vsel %vm1387, %v1480, 2147483647
  %v1483 = vrot.slane %v1482, 4
  %vm1484 = vcmp.lt.s32.totalorder %v1482, %v1483
  %v1485 = vsel %vm1484, %v1482, %v1483
  %v1486 = vrot.slane %v1485, 2
  %vm1487 = vcmp.lt.s32.totalorder %v1485, %v1486
  %v1488 = vsel %vm1487, %v1485, %v1486
  %v1489 = vrot.slane %v1488, 1
  %vm1490 = vcmp.lt.s32.totalorder %v1488, %v1489
  %v1491 = vsel %vm1490, %v1488, %v1489
  %v1492 = vsel %vm1387, %v1481, 2147483647
  %v1493 = vrot.slane %v1492, 4
  %vm1494 = vcmp.lt.s32.totalorder %v1492, %v1493
  %v1495 = vsel %vm1494, %v1492, %v1493
  %v1496 = vrot.slane %v1495, 2
  %vm1497 = vcmp.lt.s32.totalorder %v1495, %v1496
  %v1498 = vsel %vm1497, %v1495, %v1496
  %v1499 = vrot.slane %v1498, 1
  %vm1500 = vcmp.lt.s32.totalorder %v1498, %v1499
  %v1501 = vsel %vm1500, %v1498, %v1499
  %v1502 = vsel %vm1426, %v1501, %v1491
  %s1503 = scalar_lea.vmem %s9, 4
  %1504 = vst.msk [vmem:[%s1503] sm:$0x3] %vm1349, %v1502
  %v1507 = vsel %vm1426, %v1477, %v1470
  %v1509 = vmul.f32 %v757, %v1507
  %v1510 = vmul.f32 %v764, %v1436
  %v1511 = vadd.f32 %v1509, %v1510
  %v1512 = vperm.slane %v1511, 0
  %v1513 = vlaneseq
  %v1514 = vshrl.u32 %v1513, 7
  %1516 = vset.pattern.permute.xlu0 %v1514
  %1517 = vperm.xlu0 %1516, %v1512
  %v1518 = vpop.permute.xlu0 %1517
  %v1519 = vperm.slane %v1511, 1
  %v1520 = vlaneseq
  %v1521 = vshrl.u32 %v1520, 7
  %1523 = vset.pattern.permute.xlu0 %v1521
  %1524 = vperm.xlu0 %1523, %v1519
  %v1525 = vpop.permute.xlu0 %1524
  %v1526 = vadd.f32 %v1518, %v36
  %v1527 = vadd.f32 %v1525, %v36
  %1528 = vst [vmem:[#allocation1] sm:$0xff] %v1331
  %s1529 = scalar_lea.vmem [#allocation1], 6
  %v1530 = vld [vmem:[%s1529] ss:$9 sm:$0xff]
  %s1531 = scalar_lea.vmem [#allocation1], 7
  %v1532 = vld [vmem:[%s1531] ss:$9 sm:$0xff]
  %v1533 = vperm.slane %v1530, 0
  %v1534 = vperm.slane %v1532, 0
  %v1537 = vadd.f32 %v1526, %v1533
  %v1538 = vadd.f32 %v1527, %v1534
  %v1539 = vsel %vm1387, %v1537, -inf
  %v1540 = vrot.slane %v1539, 4
  %v1541 = vmax.f32 %v1539, %v1540
  %v1542 = vrot.slane %v1541, 2
  %v1543 = vmax.f32 %v1541, %v1542
  %v1544 = vrot.slane %v1543, 1
  %v1545 = vmax.f32 %v1543, %v1544
  %v1546 = vsel %vm1387, %v1538, -inf
  %v1547 = vrot.slane %v1546, 4
  %v1548 = vmax.f32 %v1546, %v1547
  %v1549 = vrot.slane %v1548, 2
  %v1550 = vmax.f32 %v1548, %v1549
  %v1551 = vrot.slane %v1550, 1
  %v1552 = vmax.f32 %v1550, %v1551
  %vm1553 = vcmp.eq.f32.partialorder %v1537, %v1545
  %vm1554 = vcmp.eq.f32.partialorder %v1538, %v1552
  %v1555 = vsel %vm1553, %v471, 5
  %v1556 = vsel %vm1554, %v471, 5
  %v1557 = vsel %vm1387, %v1555, 2147483647
  %v1558 = vrot.slane %v1557, 4
  %vm1559 = vcmp.lt.s32.totalorder %v1557, %v1558
  %v1560 = vsel %vm1559, %v1557, %v1558
  %v1561 = vrot.slane %v1560, 2
  %vm1562 = vcmp.lt.s32.totalorder %v1560, %v1561
  %v1563 = vsel %vm1562, %v1560, %v1561
  %v1564 = vrot.slane %v1563, 1
  %vm1565 = vcmp.lt.s32.totalorder %v1563, %v1564
  %v1566 = vsel %vm1565, %v1563, %v1564
  %v1567 = vsel %vm1387, %v1556, 2147483647
  %v1568 = vrot.slane %v1567, 4
  %vm1569 = vcmp.lt.s32.totalorder %v1567, %v1568
  %v1570 = vsel %vm1569, %v1567, %v1568
  %v1571 = vrot.slane %v1570, 2
  %vm1572 = vcmp.lt.s32.totalorder %v1570, %v1571
  %v1573 = vsel %vm1572, %v1570, %v1571
  %v1574 = vrot.slane %v1573, 1
  %vm1575 = vcmp.lt.s32.totalorder %v1573, %v1574
  %v1576 = vsel %vm1575, %v1573, %v1574
  %v1577 = vsel %vm1426, %v1576, %v1566
  %s1578 = scalar_lea.vmem %s9, 6
  %1579 = vst.msk [vmem:[%s1578] sm:$0x3] %vm1349, %v1577
  %v1582 = vsel %vm1426, %v1552, %v1545
  %v1584 = vmul.f32 %v851, %v1582
  %v1585 = vmul.f32 %v858, %v1511
  %v1586 = vadd.f32 %v1584, %v1585
  %v1587 = vperm.slane %v1586, 0
  %v1588 = vlaneseq
  %v1589 = vshrl.u32 %v1588, 7
  %1591 = vset.pattern.permute.xlu0 %v1589
  %1592 = vperm.xlu0 %1591, %v1587
  %v1593 = vpop.permute.xlu0 %1592
  %v1594 = vperm.slane %v1586, 1
  %v1595 = vlaneseq
  %v1596 = vshrl.u32 %v1595, 7
  %1598 = vset.pattern.permute.xlu0 %v1596
  %1599 = vperm.xlu0 %1598, %v1594
  %v1600 = vpop.permute.xlu0 %1599
  %v1601 = vadd.f32 %v1593, %v36
  %v1602 = vadd.f32 %v1600, %v36
  %v1603 = vrot.slane %v1333, 1
  %v1604 = vperm.slane %v1333, 0
  %v1605 = vperm.slane %v1603, 0
  %v1608 = vadd.f32 %v1601, %v1604
  %v1609 = vadd.f32 %v1602, %v1605
  %v1610 = vsel %vm1387, %v1608, -inf
  %v1611 = vrot.slane %v1610, 4
  %v1612 = vmax.f32 %v1610, %v1611
  %v1613 = vrot.slane %v1612, 2
  %v1614 = vmax.f32 %v1612, %v1613
  %v1615 = vrot.slane %v1614, 1
  %v1616 = vmax.f32 %v1614, %v1615
  %v1617 = vsel %vm1387, %v1609, -inf
  %v1618 = vrot.slane %v1617, 4
  %v1619 = vmax.f32 %v1617, %v1618
  %v1620 = vrot.slane %v1619, 2
  %v1621 = vmax.f32 %v1619, %v1620
  %v1622 = vrot.slane %v1621, 1
  %v1623 = vmax.f32 %v1621, %v1622
  %vm1624 = vcmp.eq.f32.partialorder %v1608, %v1616
  %vm1625 = vcmp.eq.f32.partialorder %v1609, %v1623
  %v1626 = vsel %vm1624, %v471, 5
  %v1627 = vsel %vm1625, %v471, 5
  %v1628 = vsel %vm1387, %v1626, 2147483647
  %v1629 = vrot.slane %v1628, 4
  %vm1630 = vcmp.lt.s32.totalorder %v1628, %v1629
  %v1631 = vsel %vm1630, %v1628, %v1629
  %v1632 = vrot.slane %v1631, 2
  %vm1633 = vcmp.lt.s32.totalorder %v1631, %v1632
  %v1634 = vsel %vm1633, %v1631, %v1632
  %v1635 = vrot.slane %v1634, 1
  %vm1636 = vcmp.lt.s32.totalorder %v1634, %v1635
  %v1637 = vsel %vm1636, %v1634, %v1635
  %v1638 = vsel %vm1387, %v1627, 2147483647
  %v1639 = vrot.slane %v1638, 4
  %vm1640 = vcmp.lt.s32.totalorder %v1638, %v1639
  %v1641 = vsel %vm1640, %v1638, %v1639
  %v1642 = vrot.slane %v1641, 2
  %vm1643 = vcmp.lt.s32.totalorder %v1641, %v1642
  %v1644 = vsel %vm1643, %v1641, %v1642
  %v1645 = vrot.slane %v1644, 1
  %vm1646 = vcmp.lt.s32.totalorder %v1644, %v1645
  %v1647 = vsel %vm1646, %v1644, %v1645
  %v1648 = vsel %vm1426, %v1647, %v1637
  %s1649 = scalar_lea.vmem %s9, 8
  %1650 = vst.msk [vmem:[%s1649] sm:$0x3] %vm1349, %v1648
  %v1653 = vsel %vm1426, %v1623, %v1616
  %v1655 = vmul.f32 %v944, %v1653
  %v1656 = vmul.f32 %v951, %v1586
  %v1657 = vadd.f32 %v1655, %v1656
  %v1658 = vperm.slane %v1657, 0
  %v1659 = vlaneseq
  %v1660 = vshrl.u32 %v1659, 7
  %1662 = vset.pattern.permute.xlu0 %v1660
  %1663 = vperm.xlu0 %1662, %v1658
  %v1664 = vpop.permute.xlu0 %1663
  %v1665 = vperm.slane %v1657, 1
  %v1666 = vlaneseq
  %v1667 = vshrl.u32 %v1666, 7
  %1669 = vset.pattern.permute.xlu0 %v1667
  %1670 = vperm.xlu0 %1669, %v1665
  %v1671 = vpop.permute.xlu0 %1670
  %v1672 = vadd.f32 %v1664, %v36
  %v1673 = vadd.f32 %v1671, %v36
  %1674 = vst [vmem:[#allocation1] sm:$0xff] %v1333
  %s1675 = scalar_lea.vmem [#allocation1], 2
  %v1676 = vld [vmem:[%s1675] ss:$9 sm:$0xff]
  %s1677 = scalar_lea.vmem [#allocation1], 3
  %v1678 = vld [vmem:[%s1677] ss:$9 sm:$0xff]
  %v1679 = vperm.slane %v1676, 0
  %v1680 = vperm.slane %v1678, 0
  %v1683 = vadd.f32 %v1672, %v1679
  %v1684 = vadd.f32 %v1673, %v1680
  %v1685 = vsel %vm1387, %v1683, -inf
  %v1686 = vrot.slane %v1685, 4
  %v1687 = vmax.f32 %v1685, %v1686
  %v1688 = vrot.slane %v1687, 2
  %v1689 = vmax.f32 %v1687, %v1688
  %v1690 = vrot.slane %v1689, 1
  %v1691 = vmax.f32 %v1689, %v1690
  %v1692 = vsel %vm1387, %v1684, -inf
  %v1693 = vrot.slane %v1692, 4
  %v1694 = vmax.f32 %v1692, %v1693
  %v1695 = vrot.slane %v1694, 2
  %v1696 = vmax.f32 %v1694, %v1695
  %v1697 = vrot.slane %v1696, 1
  %v1698 = vmax.f32 %v1696, %v1697
  %vm1699 = vcmp.eq.f32.partialorder %v1683, %v1691
  %vm1700 = vcmp.eq.f32.partialorder %v1684, %v1698
  %v1701 = vsel %vm1699, %v471, 5
  %v1702 = vsel %vm1700, %v471, 5
  %v1703 = vsel %vm1387, %v1701, 2147483647
  %v1704 = vrot.slane %v1703, 4
  %vm1705 = vcmp.lt.s32.totalorder %v1703, %v1704
  %v1706 = vsel %vm1705, %v1703, %v1704
  %v1707 = vrot.slane %v1706, 2
  %vm1708 = vcmp.lt.s32.totalorder %v1706, %v1707
  %v1709 = vsel %vm1708, %v1706, %v1707
  %v1710 = vrot.slane %v1709, 1
  %vm1711 = vcmp.lt.s32.totalorder %v1709, %v1710
  %v1712 = vsel %vm1711, %v1709, %v1710
  %v1713 = vsel %vm1387, %v1702, 2147483647
  %v1714 = vrot.slane %v1713, 4
  %vm1715 = vcmp.lt.s32.totalorder %v1713, %v1714
  %v1716 = vsel %vm1715, %v1713, %v1714
  %v1717 = vrot.slane %v1716, 2
  %vm1718 = vcmp.lt.s32.totalorder %v1716, %v1717
  %v1719 = vsel %vm1718, %v1716, %v1717
  %v1720 = vrot.slane %v1719, 1
  %vm1721 = vcmp.lt.s32.totalorder %v1719, %v1720
  %v1722 = vsel %vm1721, %v1719, %v1720
  %v1723 = vsel %vm1426, %v1722, %v1712
  %s1724 = scalar_lea.vmem %s9, 10
  %1725 = vst.msk [vmem:[%s1724] sm:$0x3] %vm1349, %v1723
  %v1728 = vsel %vm1426, %v1698, %v1691
  %v1730 = vmul.f32 %v1039, %v1728
  %v1731 = vmul.f32 %v1046, %v1657
  %v1732 = vadd.f32 %v1730, %v1731
  %v1733 = vperm.slane %v1732, 0
  %v1734 = vlaneseq
  %v1735 = vshrl.u32 %v1734, 7
  %1737 = vset.pattern.permute.xlu0 %v1735
  %1738 = vperm.xlu0 %1737, %v1733
  %v1739 = vpop.permute.xlu0 %1738
  %v1740 = vperm.slane %v1732, 1
  %v1741 = vlaneseq
  %v1742 = vshrl.u32 %v1741, 7
  %1744 = vset.pattern.permute.xlu0 %v1742
  %1745 = vperm.xlu0 %1744, %v1740
  %v1746 = vpop.permute.xlu0 %1745
  %v1747 = vadd.f32 %v1739, %v36
  %v1748 = vadd.f32 %v1746, %v36
  %1749 = vst [vmem:[#allocation1] sm:$0xff] %v1333
  %s1750 = scalar_lea.vmem [#allocation1], 4
  %v1751 = vld [vmem:[%s1750] ss:$9 sm:$0xff]
  %s1752 = scalar_lea.vmem [#allocation1], 5
  %v1753 = vld [vmem:[%s1752] ss:$9 sm:$0xff]
  %v1754 = vperm.slane %v1751, 0
  %v1755 = vperm.slane %v1753, 0
  %v1758 = vadd.f32 %v1747, %v1754
  %v1759 = vadd.f32 %v1748, %v1755
  %v1760 = vsel %vm1387, %v1758, -inf
  %v1761 = vrot.slane %v1760, 4
  %v1762 = vmax.f32 %v1760, %v1761
  %v1763 = vrot.slane %v1762, 2
  %v1764 = vmax.f32 %v1762, %v1763
  %v1765 = vrot.slane %v1764, 1
  %v1766 = vmax.f32 %v1764, %v1765
  %v1767 = vsel %vm1387, %v1759, -inf
  %v1768 = vrot.slane %v1767, 4
  %v1769 = vmax.f32 %v1767, %v1768
  %v1770 = vrot.slane %v1769, 2
  %v1771 = vmax.f32 %v1769, %v1770
  %v1772 = vrot.slane %v1771, 1
  %v1773 = vmax.f32 %v1771, %v1772
  %vm1774 = vcmp.eq.f32.partialorder %v1758, %v1766
  %vm1775 = vcmp.eq.f32.partialorder %v1759, %v1773
  %v1776 = vsel %vm1774, %v471, 5
  %v1777 = vsel %vm1775, %v471, 5
  %v1778 = vsel %vm1387, %v1776, 2147483647
  %v1779 = vrot.slane %v1778, 4
  %vm1780 = vcmp.lt.s32.totalorder %v1778, %v1779
  %v1781 = vsel %vm1780, %v1778, %v1779
  %v1782 = vrot.slane %v1781, 2
  %vm1783 = vcmp.lt.s32.totalorder %v1781, %v1782
  %v1784 = vsel %vm1783, %v1781, %v1782
  %v1785 = vrot.slane %v1784, 1
  %vm1786 = vcmp.lt.s32.totalorder %v1784, %v1785
  %v1787 = vsel %vm1786, %v1784, %v1785
  %v1788 = vsel %vm1387, %v1777, 2147483647
  %v1789 = vrot.slane %v1788, 4
  %vm1790 = vcmp.lt.s32.totalorder %v1788, %v1789
  %v1791 = vsel %vm1790, %v1788, %v1789
  %v1792 = vrot.slane %v1791, 2
  %vm1793 = vcmp.lt.s32.totalorder %v1791, %v1792
  %v1794 = vsel %vm1793, %v1791, %v1792
  %v1795 = vrot.slane %v1794, 1
  %vm1796 = vcmp.lt.s32.totalorder %v1794, %v1795
  %v1797 = vsel %vm1796, %v1794, %v1795
  %v1798 = vsel %vm1426, %v1797, %v1787
  %s1799 = scalar_lea.vmem %s9, 12
  %1800 = vst.msk [vmem:[%s1799] sm:$0x3] %vm1349, %v1798
  %v1803 = vsel %vm1426, %v1773, %v1766
  %v1805 = vmul.f32 %v1131, %v1803
  %v1806 = vmul.f32 %v1138, %v1732
  %v1807 = vadd.f32 %v1805, %v1806
  %v1808 = vperm.slane %v1807, 0
  %v1809 = vlaneseq
  %v1810 = vshrl.u32 %v1809, 7
  %1812 = vset.pattern.permute.xlu0 %v1810
  %1813 = vperm.xlu0 %1812, %v1808
  %v1814 = vpop.permute.xlu0 %1813
  %v1815 = vperm.slane %v1807, 1
  %v1816 = vlaneseq
  %v1817 = vshrl.u32 %v1816, 7
  %1819 = vset.pattern.permute.xlu0 %v1817
  %1820 = vperm.xlu0 %1819, %v1815
  %v1821 = vpop.permute.xlu0 %1820
  %v1822 = vadd.f32 %v1814, %v36
  %v1823 = vadd.f32 %v1821, %v36
  %1824 = vst [vmem:[#allocation1] sm:$0xff] %v1333
  %s1825 = scalar_lea.vmem [#allocation1], 6
  %v1826 = vld [vmem:[%s1825] ss:$9 sm:$0xff]
  %s1827 = scalar_lea.vmem [#allocation1], 7
  %v1828 = vld [vmem:[%s1827] ss:$9 sm:$0xff]
  %v1829 = vperm.slane %v1826, 0
  %v1830 = vperm.slane %v1828, 0
  %v1833 = vadd.f32 %v1822, %v1829
  %v1834 = vadd.f32 %v1823, %v1830
  %v1835 = vsel %vm1387, %v1833, -inf
  %v1836 = vrot.slane %v1835, 4
  %v1837 = vmax.f32 %v1835, %v1836
  %v1838 = vrot.slane %v1837, 2
  %v1839 = vmax.f32 %v1837, %v1838
  %v1840 = vrot.slane %v1839, 1
  %v1841 = vmax.f32 %v1839, %v1840
  %v1842 = vsel %vm1387, %v1834, -inf
  %v1843 = vrot.slane %v1842, 4
  %v1844 = vmax.f32 %v1842, %v1843
  %v1845 = vrot.slane %v1844, 2
  %v1846 = vmax.f32 %v1844, %v1845
  %v1847 = vrot.slane %v1846, 1
  %v1848 = vmax.f32 %v1846, %v1847
  %vm1849 = vcmp.eq.f32.partialorder %v1833, %v1841
  %vm1850 = vcmp.eq.f32.partialorder %v1834, %v1848
  %v1851 = vsel %vm1849, %v471, 5
  %v1852 = vsel %vm1850, %v471, 5
  %v1853 = vsel %vm1387, %v1851, 2147483647
  %v1854 = vrot.slane %v1853, 4
  %vm1855 = vcmp.lt.s32.totalorder %v1853, %v1854
  %v1856 = vsel %vm1855, %v1853, %v1854
  %v1857 = vrot.slane %v1856, 2
  %vm1858 = vcmp.lt.s32.totalorder %v1856, %v1857
  %v1859 = vsel %vm1858, %v1856, %v1857
  %v1860 = vrot.slane %v1859, 1
  %vm1861 = vcmp.lt.s32.totalorder %v1859, %v1860
  %v1862 = vsel %vm1861, %v1859, %v1860
  %v1863 = vsel %vm1387, %v1852, 2147483647
  %v1864 = vrot.slane %v1863, 4
  %vm1865 = vcmp.lt.s32.totalorder %v1863, %v1864
  %v1866 = vsel %vm1865, %v1863, %v1864
  %v1867 = vrot.slane %v1866, 2
  %vm1868 = vcmp.lt.s32.totalorder %v1866, %v1867
  %v1869 = vsel %vm1868, %v1866, %v1867
  %v1870 = vrot.slane %v1869, 1
  %vm1871 = vcmp.lt.s32.totalorder %v1869, %v1870
  %v1872 = vsel %vm1871, %v1869, %v1870
  %v1873 = vsel %vm1426, %v1872, %v1862
  %s1874 = scalar_lea.vmem %s9, 14
  %1875 = vst.msk [vmem:[%s1874] sm:$0x3] %vm1349, %v1873
  %v1878 = vsel %vm1426, %v1848, %v1841
  %v1880 = vmul.f32 %v1225, %v1878
  %v1881 = vsub.f32 1.0, %v469
  %1883 = vset.pattern.permute.xlu0 0
  %1884 = vperm.xlu0 %1883, %v1881
  %v1885 = vpop.permute.xlu0 %1884
  %v1887 = vmul.f32 %v1885, %v1807
  %v1888 = vadd.f32 %v1880, %v1887
  %v1889 = vadd.f32 %v1888, %v35
  %1890 = vst.msk [vmem:[%s8] sm:$0x3] %vm1349, %v1889
  // Predicated region
  $region30: #{row_classifier_forward.1} parent=0 // pred_check
    _
  $region31: #{row_classifier_forward.1} parent=0 // pred_check_branch
    %1892 = sbr.rel (0) target = $region33
  $region32: #{row_classifier_forward.1} parent=0 // pred_region
    _
  $region33: #{row_classifier_forward.1} parent=0 // pred_fallthru
    _
  // Predicated region
  $region34: #{row_classifier_forward.1} parent=0 // pred_check
    _
  $region35: #{row_classifier_forward.1} parent=0 // pred_check_branch
    %1894 = sbr.rel (0) target = $region37
  $region36: #{row_classifier_forward.1} parent=0 // pred_region
    _
  $region37: #{row_classifier_forward.1} parent=0 // pred_fallthru
    _
  // Predicated region
  $region38: #{row_classifier_forward.1} parent=0 // pred_check
    _
  $region39: #{row_classifier_forward.1} parent=0 // pred_check_branch
    %1896 = sbr.rel (0) target = $region41
  $region40: #{row_classifier_forward.1} parent=0 // pred_region
    _
  $region41: #{row_classifier_forward.1} parent=0 // pred_fallthru
    _
  // Predicated region
  $region42: #{row_classifier_forward.1} parent=0 // pred_check
    _
  $region43: #{row_classifier_forward.1} parent=0 // pred_check_branch
    %1898 = sbr.rel (0) target = $region45
  $region44: #{row_classifier_forward.1} parent=0 // pred_region
    _
  $region45: #{row_classifier_forward.1} parent=0 // pred_fallthru
    _
  // Predicated region
  $region46: #{row_classifier_forward.1} parent=0 // pred_check
    _
  $region47: #{row_classifier_forward.1} parent=0 // pred_check_branch
    %1900 = sbr.rel (0) target = $region49
  $region48: #{row_classifier_forward.1} parent=0 // pred_region
    _
  $region49: #{row_classifier_forward.1} parent=0 // pred_fallthru
    _
  // Predicated region
  $region50: #{row_classifier_forward.1} parent=0 // pred_check
    _
  $region51: #{row_classifier_forward.1} parent=0 // pred_check_branch
    %1902 = sbr.rel (0) target = $region53
  $region52: #{row_classifier_forward.1} parent=0 // pred_region
    _
  $region53: #{row_classifier_forward.1} parent=0 // pred_fallthru
    _

</llo_original>
